<compile_context>
chip_gen: v7x
topology: tpu7x:2x2x1
jax: 0.10.0
libtpu: 0.0.40
codegen_flags: <defaults>
</compile_context>

<pallas_src>
import numpy as np
import jax
import jax.numpy as jnp
from jax.experimental import pallas as pl
from jax.experimental.pallas import tpu as pltpu

# ----------------------------- problem sizes -------------------------------
IMG_C, IMG_H, IMG_W = 3, 8, 8
CONV_COUT, K = 8, 3
IMG_SIZE = IMG_C * IMG_H * IMG_W           # 192
SHELF_SIZE = 16
HEALTH_SIZE = 8
SIZES = (IMG_SIZE, SHELF_SIZE, HEALTH_SIZE)
OBS_DIM = sum(SIZES)                        # 216

CONV_FLAT = CONV_COUT * IMG_H * IMG_W       # 512
IMG_FEAT = 64
INV_HID, INV_FEAT = 32, 32
FINAL_HID = 64
ACTION_DIM = 6                              # final_network.output_size

_PARAM_ORDER = ('conv_m', 'conv_b', 'w_imgfc', 'b_imgfc',
                'w_inv1', 'b_inv1', 'w_inv2', 'b_inv2',
                'wf1_img', 'wf1_inv', 'wf1_h', 'b_f1',
                'w_f2', 'b_f2')


# ------------------------------ Pallas kernel -------------------------------
def _fused_kernel(obs_ref, conv_m_ref, conv_b_ref, w_imgfc_ref, b_imgfc_ref,
                  w_inv1_ref, b_inv1_ref, w_inv2_ref, b_inv2_ref,
                  wf1_img_ref, wf1_inv_ref, wf1_h_ref, b_f1_ref,
                  w_f2_ref, b_f2_ref, out_ref):
    """Entire forward pass for one batch tile, fused in a single kernel."""
    f32 = jnp.float32
    obs = obs_ref[...]                                           # (tb, 216)
    img = obs[:, :IMG_SIZE]                                      # (tb, 192) NCHW-flat
    shelf = obs[:, IMG_SIZE:IMG_SIZE + SHELF_SIZE]               # (tb, 16)
    health = obs[:, IMG_SIZE + SHELF_SIZE:]                      # (tb, 8)

    # img_network: Conv2d as an unrolled (192, 512) matmul + ReLU, then FC + ReLU.
    conv = jnp.maximum(
        jnp.dot(img, conv_m_ref[...], preferred_element_type=f32)
        + conv_b_ref[...], 0.0)                                  # (tb, 512)
    x_img = jnp.maximum(
        jnp.dot(conv, w_imgfc_ref[...], preferred_element_type=f32)
        + b_imgfc_ref[...], 0.0)                                 # (tb, 64)

    # inventory_network: Linear(16->32)+ReLU, Linear(32->32)+ReLU.
    h_inv = jnp.maximum(
        jnp.dot(shelf, w_inv1_ref[...], preferred_element_type=f32)
        + b_inv1_ref[...], 0.0)
    x_inv = jnp.maximum(
        jnp.dot(h_inv, w_inv2_ref[...], preferred_element_type=f32)
        + b_inv2_ref[...], 0.0)                                  # (tb, 32)

    # final_network: concat([x_img, x_inv, health]) @ Wf1 expressed as a sum of
    # matmuls against row-partitions of Wf1 (no in-kernel concat).
    h = (jnp.dot(x_img, wf1_img_ref[...], preferred_element_type=f32)
         + jnp.dot(x_inv, wf1_inv_ref[...], preferred_element_type=f32)
         + jnp.dot(health, wf1_h_ref[...], preferred_element_type=f32)
         + b_f1_ref[...])
    h = jnp.maximum(h, 0.0)                                      # (tb, 64)
    logits = jnp.dot(h, w_f2_ref[...], preferred_element_type=f32) + b_f2_ref[...]

    # stable softmax over actions; reciprocal on the EUP slot.
    m = jnp.max(logits, axis=-1, keepdims=True)
    e = jnp.exp(logits - m)
    denom = jnp.sum(e, axis=-1, keepdims=True)
    out_ref[...] = e * pl.reciprocal(denom, approx=True)


# ------------------------------ parameter init ------------------------------
def _conv_shift_masks():
    """S[s, p_in, p_out] = 1 iff kernel tap s maps padded-input pixel p_in to
    output pixel p_out for a 3x3 / pad=1 conv over the 8x8 grid."""
    S = np.zeros((K * K, IMG_H * IMG_W, IMG_H * IMG_W), np.float32)
    for ki in range(K):
        for kj in range(K):
            for h in range(IMG_H):
                for w in range(IMG_W):
                    hi, wi = h + ki - 1, w + kj - 1
                    if 0 <= hi < IMG_H and 0 <= wi < IMG_W:
                        S[ki * K + kj, hi * IMG_W + wi, h * IMG_W + w] = 1.0
    return jnp.asarray(S)


def init_params(key):
    def lin(k, fan_in, fan_out):
        kw, kb = jax.random.split(k)
        s = 1.0 / float(np.sqrt(fan_in))
        w = jax.random.uniform(kw, (fan_in, fan_out), jnp.float32, -s, s)
        b = jax.random.uniform(kb, (1, fan_out), jnp.float32, -s, s)
        return w, b

    keys = jax.random.split(key, 6)
    p = {}

    # Conv2d(3->8, 3x3, pad=1) weights, PyTorch-style uniform init.
    s = 1.0 / float(np.sqrt(IMG_C * K * K))
    kcw, kcb = jax.random.split(keys[0])
    conv_w = jax.random.uniform(kcw, (CONV_COUT, IMG_C, K, K), jnp.float32, -s, s)
    conv_b = jax.random.uniform(kcb, (CONV_COUT,), jnp.float32, -s, s)
    p['raw_conv_w'], p['raw_conv_b'] = conv_w, conv_b           # for reference check only

    # Unrolled-conv Toeplitz matrix: rows = NCHW-flat input (ci*64+h*8+w),
    # cols = NCHW-flat output (c*64+h*8+w).
    S = _conv_shift_masks()                                     # (9, 64, 64)
    m4 = jnp.einsum('cis,spq->ipcq', conv_w.reshape(CONV_COUT, IMG_C, K * K), S)
    p['conv_m'] = m4.reshape(IMG_SIZE, CONV_FLAT)               # (192, 512)
    p['conv_b'] = jnp.repeat(conv_b, IMG_H * IMG_W)[None, :]    # (1, 512)

    p['w_imgfc'], p['b_imgfc'] = lin(keys[1], CONV_FLAT, IMG_FEAT)
    p['w_inv1'], p['b_inv1'] = lin(keys[2], SHELF_SIZE, INV_HID)
    p['w_inv2'], p['b_inv2'] = lin(keys[3], INV_HID, INV_FEAT)

    wf1, bf1 = lin(keys[4], IMG_FEAT + INV_FEAT + HEALTH_SIZE, FINAL_HID)
    p['wf1_img'] = wf1[:IMG_FEAT]
    p['wf1_inv'] = wf1[IMG_FEAT:IMG_FEAT + INV_FEAT]
    p['wf1_h'] = wf1[IMG_FEAT + INV_FEAT:]
    p['b_f1'] = bf1
    p['w_f2'], p['b_f2'] = lin(keys[5], FINAL_HID, ACTION_DIM)
    return p


# ------------------------------ wrapper -------------------------------------
def _round_up(x, m):
    return ((x + m - 1) // m) * m


def forward(obs, params, tile_b=256):
    """Equivalent of FoodNetworkMediumPartialObsTaskHealth.forward."""
    if obs.ndim < 2:
        obs = obs[None, :]
    obs = obs.astype(jnp.float32)
    B, D = obs.shape
    assert D == OBS_DIM, 'not all of obs used'

    tb = min(tile_b, _round_up(B, 8))       # f32 sublane multiple
    Bp = _round_up(B, tb)
    if Bp != B:
        obs = jnp.pad(obs, ((0, Bp - B), (0, 0)))

    weights = [params[k] for k in _PARAM_ORDER]
    in_specs = [pl.BlockSpec((tb, OBS_DIM), lambda i: (i, 0))]
    in_specs += [pl.BlockSpec(w.shape, lambda i: (0, 0)) for w in weights]

    out = pl.pallas_call(
        _fused_kernel,
        grid=(Bp // tb,),
        in_specs=in_specs,
        out_specs=pl.BlockSpec((tb, ACTION_DIM), lambda i: (i, 0)),
        out_shape=jax.ShapeDtypeStruct((Bp, ACTION_DIM), jnp.float32),
        compiler_params=pltpu.CompilerParams(
            dimension_semantics=("parallel",)),
    )(obs, *weights)
    return out[:B]

# TODO(synk): get_action's Categorical(dist_vec).sample().item() host-side sampling
#             is not a kernel op; only forward() is implemented here.


# ------------------------------ pure-JAX reference ---------------------------
def _reference_forward(obs, params):
    if obs.ndim < 2:
        obs = obs[None, :]
    img = obs[:, :IMG_SIZE].reshape(-1, IMG_C, IMG_H, IMG_W)
    shelf = obs[:, IMG_SIZE:IMG_SIZE + SHELF_SIZE]
    health = obs[:, IMG_SIZE + SHELF_SIZE:]
    conv = jax.lax.conv_general_dilated(
        img, params['raw_conv_w'], window_strides=(1, 1),
        padding=((1, 1), (1, 1)), dimension_numbers=('NCHW', 'OIHW', 'NCHW'))
    conv = jax.nn.relu(conv + params['raw_conv_b'][None, :, None, None])
    x = conv.reshape(conv.shape[0], -1)                          # NCHW flatten
    x_img = jax.nn.relu(x @ params['w_imgfc'] + params['b_imgfc'])
    h = jax.nn.relu(shelf @ params['w_inv1'] + params['b_inv1'])
    x_inv = jax.nn.relu(h @ params['w_inv2'] + params['b_inv2'])
    wf1 = jnp.concatenate([params['wf1_img'], params['wf1_inv'], params['wf1_h']], axis=0)
    cat = jnp.concatenate([x_img, x_inv, health], axis=1)
    h2 = jax.nn.relu(cat @ wf1 + params['b_f1'])
    logits = h2 @ params['w_f2'] + params['b_f2']
    return jax.nn.softmax(logits, axis=-1)


if __name__ == "__main__":
    key = jax.random.PRNGKey(0)
    k_params, k_obs = jax.random.split(key)
    params = init_params(k_params)

    fwd = jax.jit(forward, static_argnames=('tile_b',))

    # small batch (single grid step)
    obs2 = jax.random.normal(k_obs, (2, OBS_DIM), dtype=jnp.float32)
    out2 = jax.block_until_ready(fwd(obs2, params))
    ref2 = _reference_forward(obs2, params)
    assert out2.shape == (2, ACTION_DIM)
    assert bool(jnp.all(jnp.isfinite(out2)))
    assert bool(jnp.allclose(jnp.sum(out2, axis=-1), 1.0, atol=1e-2))
    assert bool(jnp.allclose(out2, ref2, rtol=2e-2, atol=2e-2))

    # larger batch with a multi-step grid (20 rows, tile of 8 -> padded to 24)
    obs20 = jax.random.normal(jax.random.fold_in(k_obs, 1), (20, OBS_DIM), dtype=jnp.float32)
    out20 = jax.block_until_ready(fwd(obs20, params, tile_b=8))
    ref20 = _reference_forward(obs20, params)
    assert out20.shape == (20, ACTION_DIM)
    assert bool(jnp.all(jnp.isfinite(out20)))
    assert bool(jnp.allclose(out20, ref20, rtol=2e-2, atol=2e-2))

    print("KERNEL_OK")
</pallas_src>

<mosaic_0001>
module attributes {stable_mosaic.version = 11 : i64} {
  func.func @_fused_kernel(%arg0: i32, %arg1: memref<8x216xf32, #tpu.memory_space<vmem>>, %arg2: memref<192x512xf32, #tpu.memory_space<vmem>>, %arg3: memref<1x512xf32, #tpu.memory_space<vmem>>, %arg4: memref<512x64xf32, #tpu.memory_space<vmem>>, %arg5: memref<1x64xf32, #tpu.memory_space<vmem>>, %arg6: memref<16x32xf32, #tpu.memory_space<vmem>>, %arg7: memref<1x32xf32, #tpu.memory_space<vmem>>, %arg8: memref<32x32xf32, #tpu.memory_space<vmem>>, %arg9: memref<1x32xf32, #tpu.memory_space<vmem>>, %arg10: memref<64x64xf32, #tpu.memory_space<vmem>>, %arg11: memref<32x64xf32, #tpu.memory_space<vmem>>, %arg12: memref<8x64xf32, #tpu.memory_space<vmem>>, %arg13: memref<1x64xf32, #tpu.memory_space<vmem>>, %arg14: memref<64x6xf32, #tpu.memory_space<vmem>>, %arg15: memref<1x6xf32, #tpu.memory_space<vmem>>, %arg16: memref<8x6xf32, #tpu.memory_space<vmem>>) attributes {dimension_semantics = [#tpu.dimension_semantics<parallel>], iteration_bounds = array<i64: 1>, scalar_prefetch = 0 : i64, scratch_operands = 0 : i64, tpu.core_type = #tpu.core_type<tc>, window_params = [{transform_indices = @transform_0, window_bounds = array<i64: 8, 216>}, {pipeline_mode = #tpu.pipeline_mode<synchronous>, transform_indices = @transform_1, window_bounds = array<i64: 192, 512>}, {pipeline_mode = #tpu.pipeline_mode<synchronous>, transform_indices = @transform_2, window_bounds = array<i64: 1, 512>}, {pipeline_mode = #tpu.pipeline_mode<synchronous>, transform_indices = @transform_3, window_bounds = array<i64: 512, 64>}, {pipeline_mode = #tpu.pipeline_mode<synchronous>, transform_indices = @transform_4, window_bounds = array<i64: 1, 64>}, {pipeline_mode = #tpu.pipeline_mode<synchronous>, transform_indices = @transform_5, window_bounds = array<i64: 16, 32>}, {pipeline_mode = #tpu.pipeline_mode<synchronous>, transform_indices = @transform_6, window_bounds = array<i64: 1, 32>}, {pipeline_mode = #tpu.pipeline_mode<synchronous>, transform_indices = @transform_7, window_bounds = array<i64: 32, 32>}, {pipeline_mode = #tpu.pipeline_mode<synchronous>, transform_indices = @transform_8, window_bounds = array<i64: 1, 32>}, {pipeline_mode = #tpu.pipeline_mode<synchronous>, transform_indices = @transform_9, window_bounds = array<i64: 64, 64>}, {pipeline_mode = #tpu.pipeline_mode<synchronous>, transform_indices = @transform_10, window_bounds = array<i64: 32, 64>}, {pipeline_mode = #tpu.pipeline_mode<synchronous>, transform_indices = @transform_11, window_bounds = array<i64: 8, 64>}, {pipeline_mode = #tpu.pipeline_mode<synchronous>, transform_indices = @transform_12, window_bounds = array<i64: 1, 64>}, {pipeline_mode = #tpu.pipeline_mode<synchronous>, transform_indices = @transform_13, window_bounds = array<i64: 64, 6>}, {pipeline_mode = #tpu.pipeline_mode<synchronous>, transform_indices = @transform_14, window_bounds = array<i64: 1, 6>}, {transform_indices = @transform_15, window_bounds = array<i64: 8, 6>}]} {
    %c0 = arith.constant 0 : index
    %c0_0 = arith.constant 0 : index
    %0 = vector.load %arg1[%c0, %c0_0] : memref<8x216xf32, #tpu.memory_space<vmem>>, vector<8x216xf32>
    %1 = vector.extract_strided_slice %0 {offsets = [0, 0], sizes = [8, 192], strides = [1, 1]} : vector<8x216xf32> to vector<8x192xf32>
    %2 = vector.extract_strided_slice %0 {offsets = [0, 192], sizes = [8, 16], strides = [1, 1]} : vector<8x216xf32> to vector<8x16xf32>
    %3 = vector.extract_strided_slice %0 {offsets = [0, 208], sizes = [8, 8], strides = [1, 1]} : vector<8x216xf32> to vector<8x8xf32>
    %c0_1 = arith.constant 0 : index
    %c0_2 = arith.constant 0 : index
    %4 = vector.load %arg2[%c0_1, %c0_2] : memref<192x512xf32, #tpu.memory_space<vmem>>, vector<192x512xf32>
    %cst = arith.constant dense<0.000000e+00> : vector<8x512xf32>
    %5 = tpu.matmul %1, %4, %cst {dimension_numbers = #tpu.dot_dimension_numbers<[1], [0], [0], [1], [0, 0, 1, 1], [], []>} : vector<8x192xf32>, vector<192x512xf32>, vector<8x512xf32> -> vector<8x512xf32>
    %c0_3 = arith.constant 0 : index
    %c0_4 = arith.constant 0 : index
    %6 = vector.load %arg3[%c0_3, %c0_4] : memref<1x512xf32, #tpu.memory_space<vmem>>, vector<1x512xf32>
    %7 = vector.broadcast %6 : vector<1x512xf32> to vector<8x512xf32>
    %8 = arith.addf %5, %7 : vector<8x512xf32>
    %cst_5 = arith.constant 0.000000e+00 : f32
    %9 = vector.broadcast %cst_5 : f32 to vector<8x512xf32>
    %10 = arith.maximumf %8, %9 : vector<8x512xf32>
    %c0_6 = arith.constant 0 : index
    %c0_7 = arith.constant 0 : index
    %11 = vector.load %arg4[%c0_6, %c0_7] : memref<512x64xf32, #tpu.memory_space<vmem>>, vector<512x64xf32>
    %cst_8 = arith.constant dense<0.000000e+00> : vector<8x64xf32>
    %12 = tpu.matmul %10, %11, %cst_8 {dimension_numbers = #tpu.dot_dimension_numbers<[1], [0], [0], [1], [0, 0, 1, 1], [], []>} : vector<8x512xf32>, vector<512x64xf32>, vector<8x64xf32> -> vector<8x64xf32>
    %c0_9 = arith.constant 0 : index
    %c0_10 = arith.constant 0 : index
    %13 = vector.load %arg5[%c0_9, %c0_10] : memref<1x64xf32, #tpu.memory_space<vmem>>, vector<1x64xf32>
    %14 = vector.broadcast %13 : vector<1x64xf32> to vector<8x64xf32>
    %15 = arith.addf %12, %14 : vector<8x64xf32>
    %cst_11 = arith.constant 0.000000e+00 : f32
    %16 = vector.broadcast %cst_11 : f32 to vector<8x64xf32>
    %17 = arith.maximumf %15, %16 : vector<8x64xf32>
    %c0_12 = arith.constant 0 : index
    %c0_13 = arith.constant 0 : index
    %18 = vector.load %arg6[%c0_12, %c0_13] : memref<16x32xf32, #tpu.memory_space<vmem>>, vector<16x32xf32>
    %cst_14 = arith.constant dense<0.000000e+00> : vector<8x32xf32>
    %19 = tpu.matmul %2, %18, %cst_14 {dimension_numbers = #tpu.dot_dimension_numbers<[1], [0], [0], [1], [0, 0, 1, 1], [], []>} : vector<8x16xf32>, vector<16x32xf32>, vector<8x32xf32> -> vector<8x32xf32>
    %c0_15 = arith.constant 0 : index
    %c0_16 = arith.constant 0 : index
    %20 = vector.load %arg7[%c0_15, %c0_16] : memref<1x32xf32, #tpu.memory_space<vmem>>, vector<1x32xf32>
    %21 = vector.broadcast %20 : vector<1x32xf32> to vector<8x32xf32>
    %22 = arith.addf %19, %21 : vector<8x32xf32>
    %cst_17 = arith.constant 0.000000e+00 : f32
    %23 = vector.broadcast %cst_17 : f32 to vector<8x32xf32>
    %24 = arith.maximumf %22, %23 : vector<8x32xf32>
    %c0_18 = arith.constant 0 : index
    %c0_19 = arith.constant 0 : index
    %25 = vector.load %arg8[%c0_18, %c0_19] : memref<32x32xf32, #tpu.memory_space<vmem>>, vector<32x32xf32>
    %cst_20 = arith.constant dense<0.000000e+00> : vector<8x32xf32>
    %26 = tpu.matmul %24, %25, %cst_20 {dimension_numbers = #tpu.dot_dimension_numbers<[1], [0], [0], [1], [0, 0, 1, 1], [], []>} : vector<8x32xf32>, vector<32x32xf32>, vector<8x32xf32> -> vector<8x32xf32>
    %c0_21 = arith.constant 0 : index
    %c0_22 = arith.constant 0 : index
    %27 = vector.load %arg9[%c0_21, %c0_22] : memref<1x32xf32, #tpu.memory_space<vmem>>, vector<1x32xf32>
    %28 = vector.broadcast %27 : vector<1x32xf32> to vector<8x32xf32>
    %29 = arith.addf %26, %28 : vector<8x32xf32>
    %cst_23 = arith.constant 0.000000e+00 : f32
    %30 = vector.broadcast %cst_23 : f32 to vector<8x32xf32>
    %31 = arith.maximumf %29, %30 : vector<8x32xf32>
    %c0_24 = arith.constant 0 : index
    %c0_25 = arith.constant 0 : index
    %32 = vector.load %arg10[%c0_24, %c0_25] : memref<64x64xf32, #tpu.memory_space<vmem>>, vector<64x64xf32>
    %cst_26 = arith.constant dense<0.000000e+00> : vector<8x64xf32>
    %33 = tpu.matmul %17, %32, %cst_26 {dimension_numbers = #tpu.dot_dimension_numbers<[1], [0], [0], [1], [0, 0, 1, 1], [], []>} : vector<8x64xf32>, vector<64x64xf32>, vector<8x64xf32> -> vector<8x64xf32>
    %c0_27 = arith.constant 0 : index
    %c0_28 = arith.constant 0 : index
    %34 = vector.load %arg11[%c0_27, %c0_28] : memref<32x64xf32, #tpu.memory_space<vmem>>, vector<32x64xf32>
    %cst_29 = arith.constant dense<0.000000e+00> : vector<8x64xf32>
    %35 = tpu.matmul %31, %34, %cst_29 {dimension_numbers = #tpu.dot_dimension_numbers<[1], [0], [0], [1], [0, 0, 1, 1], [], []>} : vector<8x32xf32>, vector<32x64xf32>, vector<8x64xf32> -> vector<8x64xf32>
    %36 = arith.addf %33, %35 : vector<8x64xf32>
    %c0_30 = arith.constant 0 : index
    %c0_31 = arith.constant 0 : index
    %37 = vector.load %arg12[%c0_30, %c0_31] : memref<8x64xf32, #tpu.memory_space<vmem>>, vector<8x64xf32>
    %cst_32 = arith.constant dense<0.000000e+00> : vector<8x64xf32>
    %38 = tpu.matmul %3, %37, %cst_32 {dimension_numbers = #tpu.dot_dimension_numbers<[1], [0], [0], [1], [0, 0, 1, 1], [], []>} : vector<8x8xf32>, vector<8x64xf32>, vector<8x64xf32> -> vector<8x64xf32>
    %39 = arith.addf %36, %38 : vector<8x64xf32>
    %c0_33 = arith.constant 0 : index
    %c0_34 = arith.constant 0 : index
    %40 = vector.load %arg13[%c0_33, %c0_34] : memref<1x64xf32, #tpu.memory_space<vmem>>, vector<1x64xf32>
    %41 = vector.broadcast %40 : vector<1x64xf32> to vector<8x64xf32>
    %42 = arith.addf %39, %41 : vector<8x64xf32>
    %cst_35 = arith.constant 0.000000e+00 : f32
    %43 = vector.broadcast %cst_35 : f32 to vector<8x64xf32>
    %44 = arith.maximumf %42, %43 : vector<8x64xf32>
    %c0_36 = arith.constant 0 : index
    %c0_37 = arith.constant 0 : index
    %45 = vector.load %arg14[%c0_36, %c0_37] : memref<64x6xf32, #tpu.memory_space<vmem>>, vector<64x6xf32>
    %cst_38 = arith.constant dense<0.000000e+00> : vector<8x6xf32>
    %46 = tpu.matmul %44, %45, %cst_38 {dimension_numbers = #tpu.dot_dimension_numbers<[1], [0], [0], [1], [0, 0, 1, 1], [], []>} : vector<8x64xf32>, vector<64x6xf32>, vector<8x6xf32> -> vector<8x6xf32>
    %c0_39 = arith.constant 0 : index
    %c0_40 = arith.constant 0 : index
    %47 = vector.load %arg15[%c0_39, %c0_40] : memref<1x6xf32, #tpu.memory_space<vmem>>, vector<1x6xf32>
    %48 = vector.broadcast %47 : vector<1x6xf32> to vector<8x6xf32>
    %49 = arith.addf %46, %48 : vector<8x6xf32>
    %cst_41 = arith.constant dense<0xFF800000> : vector<8xf32>
    %50 = vector.multi_reduction <maximumf>, %49, %cst_41 [1] : vector<8x6xf32> to vector<8xf32>
    %51 = vector.shape_cast %50 : vector<8xf32> to vector<8x1xf32>
    %52 = vector.broadcast %51 : vector<8x1xf32> to vector<8x6xf32>
    %53 = arith.subf %49, %52 : vector<8x6xf32>
    %54 = math.exp %53 : vector<8x6xf32>
    %cst_42 = arith.constant dense<0.000000e+00> : vector<8xf32>
    %55 = vector.multi_reduction <add>, %54, %cst_42 [1] : vector<8x6xf32> to vector<8xf32>
    %56 = vector.shape_cast %55 : vector<8xf32> to vector<8x1xf32>
    %57 = tpu.reciprocal %56 {approx = true} : vector<8x1xf32> -> vector<8x1xf32>
    %58 = vector.broadcast %57 : vector<8x1xf32> to vector<8x6xf32>
    %59 = arith.mulf %54, %58 : vector<8x6xf32>
    %c0_43 = arith.constant 0 : index
    %c0_44 = arith.constant 0 : index
    %60 = vector.load %arg16[%c0_43, %c0_44] : memref<8x6xf32, #tpu.memory_space<vmem>>, vector<8x6xf32>
    tpu.vector_store %arg16[%c0_43, %c0_44], %59 {strides = array<i32>} : memref<8x6xf32, #tpu.memory_space<vmem>>, vector<8x6xf32>,
    return
  }
  func.func @transform_0(%arg0: i32) -> (i32, i32) {
    %c0_i32 = arith.constant 0 : i32
    %c0_i32_0 = arith.constant 0 : i32
    return %arg0, %c0_i32 : i32, i32
  }
  func.func @transform_1(%arg0: i32) -> (i32, i32) {
    %c0_i32 = arith.constant 0 : i32
    %c0_i32_0 = arith.constant 0 : i32
    %c0_i32_1 = arith.constant 0 : i32
    return %c0_i32, %c0_i32_0 : i32, i32
  }
  func.func @transform_2(%arg0: i32) -> (i32, i32) {
    %c0_i32 = arith.constant 0 : i32
    %c0_i32_0 = arith.constant 0 : i32
    %c0_i32_1 = arith.constant 0 : i32
    return %c0_i32, %c0_i32_0 : i32, i32
  }
  func.func @transform_3(%arg0: i32) -> (i32, i32) {
    %c0_i32 = arith.constant 0 : i32
    %c0_i32_0 = arith.constant 0 : i32
    %c0_i32_1 = arith.constant 0 : i32
    return %c0_i32, %c0_i32_0 : i32, i32
  }
  func.func @transform_4(%arg0: i32) -> (i32, i32) {
    %c0_i32 = arith.constant 0 : i32
    %c0_i32_0 = arith.constant 0 : i32
    %c0_i32_1 = arith.constant 0 : i32
    return %c0_i32, %c0_i32_0 : i32, i32
  }
  func.func @transform_5(%arg0: i32) -> (i32, i32) {
    %c0_i32 = arith.constant 0 : i32
    %c0_i32_0 = arith.constant 0 : i32
    %c0_i32_1 = arith.constant 0 : i32
    return %c0_i32, %c0_i32_0 : i32, i32
  }
  func.func @transform_6(%arg0: i32) -> (i32, i32) {
    %c0_i32 = arith.constant 0 : i32
    %c0_i32_0 = arith.constant 0 : i32
    %c0_i32_1 = arith.constant 0 : i32
    return %c0_i32, %c0_i32_0 : i32, i32
  }
  func.func @transform_7(%arg0: i32) -> (i32, i32) {
    %c0_i32 = arith.constant 0 : i32
    %c0_i32_0 = arith.constant 0 : i32
    %c0_i32_1 = arith.constant 0 : i32
    return %c0_i32, %c0_i32_0 : i32, i32
  }
  func.func @transform_8(%arg0: i32) -> (i32, i32) {
    %c0_i32 = arith.constant 0 : i32
    %c0_i32_0 = arith.constant 0 : i32
    %c0_i32_1 = arith.constant 0 : i32
    return %c0_i32, %c0_i32_0 : i32, i32
  }
  func.func @transform_9(%arg0: i32) -> (i32, i32) {
    %c0_i32 = arith.constant 0 : i32
    %c0_i32_0 = arith.constant 0 : i32
    %c0_i32_1 = arith.constant 0 : i32
    return %c0_i32, %c0_i32_0 : i32, i32
  }
  func.func @transform_10(%arg0: i32) -> (i32, i32) {
    %c0_i32 = arith.constant 0 : i32
    %c0_i32_0 = arith.constant 0 : i32
    %c0_i32_1 = arith.constant 0 : i32
    return %c0_i32, %c0_i32_0 : i32, i32
  }
  func.func @transform_11(%arg0: i32) -> (i32, i32) {
    %c0_i32 = arith.constant 0 : i32
    %c0_i32_0 = arith.constant 0 : i32
    %c0_i32_1 = arith.constant 0 : i32
    return %c0_i32, %c0_i32_0 : i32, i32
  }
  func.func @transform_12(%arg0: i32) -> (i32, i32) {
    %c0_i32 = arith.constant 0 : i32
    %c0_i32_0 = arith.constant 0 : i32
    %c0_i32_1 = arith.constant 0 : i32
    return %c0_i32, %c0_i32_0 : i32, i32
  }
  func.func @transform_13(%arg0: i32) -> (i32, i32) {
    %c0_i32 = arith.constant 0 : i32
    %c0_i32_0 = arith.constant 0 : i32
    %c0_i32_1 = arith.constant 0 : i32
    return %c0_i32, %c0_i32_0 : i32, i32
  }
  func.func @transform_14(%arg0: i32) -> (i32, i32) {
    %c0_i32 = arith.constant 0 : i32
    %c0_i32_0 = arith.constant 0 : i32
    %c0_i32_1 = arith.constant 0 : i32
    return %c0_i32, %c0_i32_0 : i32, i32
  }
  func.func @transform_15(%arg0: i32) -> (i32, i32) {
    %c0_i32 = arith.constant 0 : i32
    %c0_i32_0 = arith.constant 0 : i32
    return %arg0, %c0_i32 : i32, i32
  }
}

</mosaic_0001>

<llo_original>
// kernel: forward.1
$region0: #{forward.1}
  #allocation0 [shape = 'u32[]', space=smem, size = 0x4, offset = 0x4, fixed_abs, tag = 'smem constant byte address 0x4 - core index']
  #allocation1 [shape = 'u32[144,128]{1,0:T(1,128)}', space=vmem, size = 0x12000, scoped, tag = 'internal scratch']
  %s0 = inlined_call_operand.vmem [shape: f32[8,216], index: 0, kind: input, shape index: {}]
  %s1 = inlined_call_operand.vmem [shape: f32[192,512], index: 1, kind: input, shape index: {}]
  %s2 = inlined_call_operand.hbm [shape: f32[1,512], index: 2, kind: input, shape index: {}]
  %s3 = inlined_call_operand.vmem [shape: f32[512,64], index: 3, kind: input, shape index: {}]
  %s4 = inlined_call_operand.vmem [shape: f32[1,64], index: 4, kind: input, shape index: {}]
  %s5 = inlined_call_operand.hbm [shape: f32[16,32], index: 5, kind: input, shape index: {}]
  %s6 = inlined_call_operand.vmem [shape: f32[1,32], index: 6, kind: input, shape index: {}]
  %s7 = inlined_call_operand.vmem [shape: f32[32,32], index: 7, kind: input, shape index: {}]
  %s8 = inlined_call_operand.hbm [shape: f32[1,32], index: 8, kind: input, shape index: {}]
  %s9 = inlined_call_operand.vmem [shape: f32[64,64], index: 9, kind: input, shape index: {}]
  %s10 = inlined_call_operand.vmem [shape: f32[32,64], index: 10, kind: input, shape index: {}]
  %s11 = inlined_call_operand.vmem [shape: f32[8,64], index: 11, kind: input, shape index: {}]
  %s12 = inlined_call_operand.hbm [shape: f32[1,64], index: 12, kind: input, shape index: {}]
  %s13 = inlined_call_operand.vmem [shape: f32[64,6], index: 13, kind: input, shape index: {}]
  %s14 = inlined_call_operand.hbm [shape: f32[1,6], index: 14, kind: input, shape index: {}]
  %s15 = inlined_call_operand.vmem [shape: f32[8,6], index: 15, kind: output, shape index: {}]
  %s16 = sld [smem:[#allocation0]]
  $region90: #{forward.1} parent=0
    _
  %s18 = ssub.s32 1, %s16
  %s19 = scalar_select 0, %s18, %s16
  $region1: #{forward.1} parent=0
    #allocation2 [shape = 'u8[2048]{0}', space=vmem, size = 0x800, scoped, tag = 'input window, operand 2, single buffered']
    #allocation3 [shape = 's32[1]{0}', space=sflag, size = 0x4, scoped, tag = 'scoped memory for forward.1']
    #allocation4 [shape = 'u8[8192]{0}', space=vmem, size = 0x2000, scoped, tag = 'input window, operand 5, single buffered']
    #allocation5 [shape = 's32[1]{0}', space=sflag, size = 0x4, scoped, tag = 'scoped memory for forward.1']
    #allocation6 [shape = 'u8[512]{0}', space=vmem, size = 0x400, scoped, tag = 'input window, operand 8, single buffered']
    #allocation7 [shape = 'u8[512]{0}', space=vmem, size = 0x400, scoped, tag = 'input window, operand 12, single buffered']
    #allocation8 [shape = 's32[1]{0}', space=sflag, size = 0x4, scoped, tag = 'scoped memory for forward.1']
    #allocation9 [shape = 'u8[512]{0}', space=vmem, size = 0x400, scoped, tag = 'input window, operand 14, single buffered']
    %20 = vsyncpa [#allocation3], 0
    %21 = vsyncpa [#allocation5], 0
    %22 = vsyncpa [#allocation8], 0
    // Predicated region
    $region2: #{forward.1} parent=1 // pred_check
      _
    $region3: #{forward.1} parent=1 // pred_check_branch
      %24 = sbr.rel (0) target = $region5
    $region4: #{forward.1} parent=1 // pred_region
      _
    $region5: #{forward.1} parent=1 // pred_fallthru
      _
    // Predicated region
    $region6: #{forward.1} parent=1 // pred_check
      _
    $region7: #{forward.1} parent=1 // pred_check_branch
      %26 = sbr.rel (0) target = $region9
    $region8: #{forward.1} parent=1 // pred_region
      _
    $region9: #{forward.1} parent=1 // pred_fallthru
      _
    // Predicated region
    $region10: #{forward.1} parent=1 // pred_check
      _
    $region11: #{forward.1} parent=1 // pred_check_branch
      %28 = sbr.rel (0) target = $region13
    $region12: #{forward.1} parent=1 // pred_region
      %s30 = ssub.s32 64, 64
      %31 = vsyncadd [#allocation3], %s30
      %s33 = sshll.u32 [#allocation2], 4
      %s34 = int_to_ptr.vmem [resolvable:$true] %s33
      %36 = dma.hbm_to_vmem [thread:$0]  %s2, 64, %s34, [#allocation3]
    $region13: #{forward.1} parent=1 // pred_fallthru
      _
    // Predicated region
    $region14: #{forward.1} parent=1 // pred_check
      _
    $region15: #{forward.1} parent=1 // pred_check_branch
      %38 = sbr.rel (0) target = $region17
    $region16: #{forward.1} parent=1 // pred_region
      _
    $region17: #{forward.1} parent=1 // pred_fallthru
      _
    // Predicated region
    $region18: #{forward.1} parent=1 // pred_check
      _
    $region19: #{forward.1} parent=1 // pred_check_branch
      %40 = sbr.rel (0) target = $region21
    $region20: #{forward.1} parent=1 // pred_region
      _
    $region21: #{forward.1} parent=1 // pred_fallthru
      _
    // Predicated region
    $region22: #{forward.1} parent=1 // pred_check
      _
    $region23: #{forward.1} parent=1 // pred_check_branch
      %42 = sbr.rel (0) target = $region25
    $region24: #{forward.1} parent=1 // pred_region
      %s44 = ssub.s32 256, 256
      %45 = vsyncadd [#allocation5], %s44
      %s46 = sshll.u32 [#allocation4], 4
      %s47 = int_to_ptr.vmem [resolvable:$true] %s46
      %52 = dma.hbm_to_vmem [thread:$0]  %s5, 256, %s47, [#allocation5], 128, 128, 8
    $region25: #{forward.1} parent=1 // pred_fallthru
      _
    // Predicated region
    $region26: #{forward.1} parent=1 // pred_check
      _
    $region27: #{forward.1} parent=1 // pred_check_branch
      %54 = sbr.rel (0) target = $region29
    $region28: #{forward.1} parent=1 // pred_region
      _
    $region29: #{forward.1} parent=1 // pred_fallthru
      _
    // Predicated region
    $region30: #{forward.1} parent=1 // pred_check
      _
    $region31: #{forward.1} parent=1 // pred_check_branch
      %56 = sbr.rel (0) target = $region33
    $region32: #{forward.1} parent=1 // pred_region
      _
    $region33: #{forward.1} parent=1 // pred_fallthru
      _
    // Predicated region
    $region34: #{forward.1} parent=1 // pred_check
      _
    $region35: #{forward.1} parent=1 // pred_check_branch
      %58 = sbr.rel (0) target = $region37
    $region36: #{forward.1} parent=1 // pred_region
      %s60 = ssub.s32 16, 16
      %61 = vsyncadd [#allocation5], %s60
      %s63 = sshll.u32 [#allocation6], 4
      %s64 = int_to_ptr.vmem [resolvable:$true] %s63
      %66 = dma.hbm_to_vmem [thread:$0]  %s8, 16, %s64, [#allocation5]
    $region37: #{forward.1} parent=1 // pred_fallthru
      _
    // Predicated region
    $region38: #{forward.1} parent=1 // pred_check
      _
    $region39: #{forward.1} parent=1 // pred_check_branch
      %68 = sbr.rel (0) target = $region41
    $region40: #{forward.1} parent=1 // pred_region
      _
    $region41: #{forward.1} parent=1 // pred_fallthru
      _
    // Predicated region
    $region42: #{forward.1} parent=1 // pred_check
      _
    $region43: #{forward.1} parent=1 // pred_check_branch
      %70 = sbr.rel (0) target = $region45
    $region44: #{forward.1} parent=1 // pred_region
      _
    $region45: #{forward.1} parent=1 // pred_fallthru
      _
    // Predicated region
    $region46: #{forward.1} parent=1 // pred_check
      _
    $region47: #{forward.1} parent=1 // pred_check_branch
      %72 = sbr.rel (0) target = $region49
    $region48: #{forward.1} parent=1 // pred_region
      _
    $region49: #{forward.1} parent=1 // pred_fallthru
      _
    // Predicated region
    $region50: #{forward.1} parent=1 // pred_check
      _
    $region51: #{forward.1} parent=1 // pred_check_branch
      %74 = sbr.rel (0) target = $region53
    $region52: #{forward.1} parent=1 // pred_region
      %s76 = ssub.s32 16, 16
      %77 = vsyncadd [#allocation8], %s76
      %s79 = sshll.u32 [#allocation7], 4
      %s80 = int_to_ptr.vmem [resolvable:$true] %s79
      %82 = dma.hbm_to_vmem [thread:$0]  %s12, 16, %s80, [#allocation8]
    $region53: #{forward.1} parent=1 // pred_fallthru
      _
    // Predicated region
    $region54: #{forward.1} parent=1 // pred_check
      _
    $region55: #{forward.1} parent=1 // pred_check_branch
      %84 = sbr.rel (0) target = $region57
    $region56: #{forward.1} parent=1 // pred_region
      _
    $region57: #{forward.1} parent=1 // pred_fallthru
      _
    // Predicated region
    $region58: #{forward.1} parent=1 // pred_check
      _
    $region59: #{forward.1} parent=1 // pred_check_branch
      %86 = sbr.rel (0) target = $region61
    $region60: #{forward.1} parent=1 // pred_region
      %s88 = ssub.s32 16, 16
      %89 = vsyncadd [#allocation8], %s88
      %s91 = sshll.u32 [#allocation9], 4
      %s92 = int_to_ptr.vmem [resolvable:$true] %s91
      %94 = dma.hbm_to_vmem [thread:$0]  %s14, 16, %s92, [#allocation8]
    $region61: #{forward.1} parent=1 // pred_fallthru
      _
    // Predicated region
    $region62: #{forward.1} parent=1 // pred_check
      _
    $region63: #{forward.1} parent=1 // pred_check_branch
      %96 = sbr.rel (0) target = $region65
    $region64: #{forward.1} parent=1 // pred_region
      %97 = dma.done [#allocation3], 64
    $region65: #{forward.1} parent=1 // pred_fallthru
      _
    // Predicated region
    $region66: #{forward.1} parent=1 // pred_check
      _
    $region67: #{forward.1} parent=1 // pred_check_branch
      %99 = sbr.rel (0) target = $region69
    $region68: #{forward.1} parent=1 // pred_region
      %100 = dma.done [#allocation5], 256
    $region69: #{forward.1} parent=1 // pred_fallthru
      _
    // Predicated region
    $region70: #{forward.1} parent=1 // pred_check
      _
    $region71: #{forward.1} parent=1 // pred_check_branch
      %102 = sbr.rel (0) target = $region73
    $region72: #{forward.1} parent=1 // pred_region
      %103 = dma.done [#allocation5], 16
    $region73: #{forward.1} parent=1 // pred_fallthru
      _
    // Predicated region
    $region74: #{forward.1} parent=1 // pred_check
      _
    $region75: #{forward.1} parent=1 // pred_check_branch
      %105 = sbr.rel (0) target = $region77
    $region76: #{forward.1} parent=1 // pred_region
      %106 = dma.done [#allocation8], 16
    $region77: #{forward.1} parent=1 // pred_fallthru
      _
    // Predicated region
    $region78: #{forward.1} parent=1 // pred_check
      _
    $region79: #{forward.1} parent=1 // pred_check_branch
      %108 = sbr.rel (0) target = $region81
    $region80: #{forward.1} parent=1 // pred_region
      %109 = dma.done [#allocation8], 16
    $region81: #{forward.1} parent=1 // pred_fallthru
      _
    %v110 = vld [vmem:[%s0] sm:$0xff]
    %v111 = vld [vmem:[%s0 + $0x8] sm:$0xff]
    %v112 = vld [vmem:[%s1] sm:$0xff]
    %v113 = vld [vmem:[%s1 + $0x8] sm:$0xff]
    %v114 = vld [vmem:[%s1 + $0x10] sm:$0xff]
    %v115 = vld [vmem:[%s1 + $0x18] sm:$0xff]
    %v116 = vld [vmem:[%s1 + $0x20] sm:$0xff]
    %v117 = vld [vmem:[%s1 + $0x28] sm:$0xff]
    %v118 = vld [vmem:[%s1 + $0x30] sm:$0xff]
    %v119 = vld [vmem:[%s1 + $0x38] sm:$0xff]
    %v120 = vld [vmem:[%s1 + $0x40] sm:$0xff]
    %v121 = vld [vmem:[%s1 + $0x48] sm:$0xff]
    %v122 = vld [vmem:[%s1 + $0x50] sm:$0xff]
    %v123 = vld [vmem:[%s1 + $0x58] sm:$0xff]
    %v124 = vld [vmem:[%s1 + $0x60] sm:$0xff]
    %v125 = vld [vmem:[%s1 + $0x68] sm:$0xff]
    %v126 = vld [vmem:[%s1 + $0x70] sm:$0xff]
    %v127 = vld [vmem:[%s1 + $0x78] sm:$0xff]
    %v128 = vld [vmem:[%s1 + $0x80] sm:$0xff]
    %v129 = vld [vmem:[%s1 + $0x88] sm:$0xff]
    %v130 = vld [vmem:[%s1 + $0x90] sm:$0xff]
    %v131 = vld [vmem:[%s1 + $0x98] sm:$0xff]
    %v132 = vld [vmem:[%s1 + $0xa0] sm:$0xff]
    %v133 = vld [vmem:[%s1 + $0xa8] sm:$0xff]
    %v134 = vld [vmem:[%s1 + $0xb0] sm:$0xff]
    %v135 = vld [vmem:[%s1 + $0xb8] sm:$0xff]
    %v136 = vld [vmem:[%s1 + $0xc0] sm:$0xff]
    %v137 = vld [vmem:[%s1 + $0xc8] sm:$0xff]
    %v138 = vld [vmem:[%s1 + $0xd0] sm:$0xff]
    %v139 = vld [vmem:[%s1 + $0xd8] sm:$0xff]
    %v140 = vld [vmem:[%s1 + $0xe0] sm:$0xff]
    %v141 = vld [vmem:[%s1 + $0xe8] sm:$0xff]
    %v142 = vld [vmem:[%s1 + $0xf0] sm:$0xff]
    %v143 = vld [vmem:[%s1 + $0xf8] sm:$0xff]
    %v144 = vld [vmem:[%s1 + $0x100] sm:$0xff]
    %v145 = vld [vmem:[%s1 + $0x108] sm:$0xff]
    %v146 = vld [vmem:[%s1 + $0x110] sm:$0xff]
    %v147 = vld [vmem:[%s1 + $0x118] sm:$0xff]
    %v148 = vld [vmem:[%s1 + $0x120] sm:$0xff]
    %v149 = vld [vmem:[%s1 + $0x128] sm:$0xff]
    %v150 = vld [vmem:[%s1 + $0x130] sm:$0xff]
    %v151 = vld [vmem:[%s1 + $0x138] sm:$0xff]
    %v152 = vld [vmem:[%s1 + $0x140] sm:$0xff]
    %v153 = vld [vmem:[%s1 + $0x148] sm:$0xff]
    %v154 = vld [vmem:[%s1 + $0x150] sm:$0xff]
    %v155 = vld [vmem:[%s1 + $0x158] sm:$0xff]
    %v156 = vld [vmem:[%s1 + $0x160] sm:$0xff]
    %v157 = vld [vmem:[%s1 + $0x168] sm:$0xff]
    %v158 = vld [vmem:[%s1 + $0x170] sm:$0xff]
    %v159 = vld [vmem:[%s1 + $0x178] sm:$0xff]
    %v160 = vld [vmem:[%s1 + $0x180] sm:$0xff]
    %v161 = vld [vmem:[%s1 + $0x188] sm:$0xff]
    %v162 = vld [vmem:[%s1 + $0x190] sm:$0xff]
    %v163 = vld [vmem:[%s1 + $0x198] sm:$0xff]
    %v164 = vld [vmem:[%s1 + $0x1a0] sm:$0xff]
    %v165 = vld [vmem:[%s1 + $0x1a8] sm:$0xff]
    %v166 = vld [vmem:[%s1 + $0x1b0] sm:$0xff]
    %v167 = vld [vmem:[%s1 + $0x1b8] sm:$0xff]
    %v168 = vld [vmem:[%s1 + $0x1c0] sm:$0xff]
    %v169 = vld [vmem:[%s1 + $0x1c8] sm:$0xff]
    %v170 = vld [vmem:[%s1 + $0x1d0] sm:$0xff]
    %v171 = vld [vmem:[%s1 + $0x1d8] sm:$0xff]
    %v172 = vld [vmem:[%s1 + $0x1e0] sm:$0xff]
    %v173 = vld [vmem:[%s1 + $0x1e8] sm:$0xff]
    %v174 = vld [vmem:[%s1 + $0x1f0] sm:$0xff]
    %v175 = vld [vmem:[%s1 + $0x1f8] sm:$0xff]
    %v176 = vld [vmem:[%s1 + $0x200] sm:$0xff]
    %v177 = vld [vmem:[%s1 + $0x208] sm:$0xff]
    %v178 = vld [vmem:[%s1 + $0x210] sm:$0xff]
    %v179 = vld [vmem:[%s1 + $0x218] sm:$0xff]
    %v180 = vld [vmem:[%s1 + $0x220] sm:$0xff]
    %v181 = vld [vmem:[%s1 + $0x228] sm:$0xff]
    %v182 = vld [vmem:[%s1 + $0x230] sm:$0xff]
    %v183 = vld [vmem:[%s1 + $0x238] sm:$0xff]
    %v184 = vld [vmem:[%s1 + $0x240] sm:$0xff]
    %v185 = vld [vmem:[%s1 + $0x248] sm:$0xff]
    %v186 = vld [vmem:[%s1 + $0x250] sm:$0xff]
    %v187 = vld [vmem:[%s1 + $0x258] sm:$0xff]
    %v188 = vld [vmem:[%s1 + $0x260] sm:$0xff]
    %v189 = vld [vmem:[%s1 + $0x268] sm:$0xff]
    %v190 = vld [vmem:[%s1 + $0x270] sm:$0xff]
    %v191 = vld [vmem:[%s1 + $0x278] sm:$0xff]
    %v192 = vld [vmem:[%s1 + $0x280] sm:$0xff]
    %v193 = vld [vmem:[%s1 + $0x288] sm:$0xff]
    %v194 = vld [vmem:[%s1 + $0x290] sm:$0xff]
    %v195 = vld [vmem:[%s1 + $0x298] sm:$0xff]
    %v196 = vld [vmem:[%s1 + $0x2a0] sm:$0xff]
    %v197 = vld [vmem:[%s1 + $0x2a8] sm:$0xff]
    %v198 = vld [vmem:[%s1 + $0x2b0] sm:$0xff]
    %v199 = vld [vmem:[%s1 + $0x2b8] sm:$0xff]
    %v200 = vld [vmem:[%s1 + $0x2c0] sm:$0xff]
    %v201 = vld [vmem:[%s1 + $0x2c8] sm:$0xff]
    %v202 = vld [vmem:[%s1 + $0x2d0] sm:$0xff]
    %v203 = vld [vmem:[%s1 + $0x2d8] sm:$0xff]
    %v204 = vld [vmem:[%s1 + $0x2e0] sm:$0xff]
    %v205 = vld [vmem:[%s1 + $0x2e8] sm:$0xff]
    %v206 = vld [vmem:[%s1 + $0x2f0] sm:$0xff]
    %v207 = vld [vmem:[%s1 + $0x2f8] sm:$0xff]
    %v208 = vld [vmem:[#allocation2] sm:$0xf]
    %v210 = vlaneseq
    %v211 = vshrl.u32 %v210, 7
    %v212 = vsub.s32 0, %v211
    %v213 = vrot.slane %v208, %v212
    %v214 = vlaneseq
    %v215 = vshrl.u32 %v214, 7
    %v216 = vsub.s32 1, %v215
    %v217 = vrot.slane %v208, %v216
    %v218 = vlaneseq
    %v219 = vshrl.u32 %v218, 7
    %v220 = vsub.s32 2, %v219
    %v221 = vrot.slane %v208, %v220
    %v222 = vlaneseq
    %v223 = vshrl.u32 %v222, 7
    %v224 = vsub.s32 3, %v223
    %v225 = vrot.slane %v208, %v224
    %vm230 = vcmask 523264
    %v232 = vsel %vm230, %v111, 0
    %234 = vmatprep.subr.mxu0 %v113
    %235 = vmatpush1.msra.mxu0 %v112
    %236 = vmatprep.subr.mxu0 %v117
    %237 = vmatpush1.msra.mxu0 %v116
    %238 = vmatprep.subr.mxu0 %v121
    %239 = vmatpush1.msra.mxu0 %v120
    %240 = vmatprep.subr.mxu0 %v125
    %241 = vmatpush1.msra.mxu0 %v124
    %242 = vmatprep.subr.mxu0 %v129
    %243 = vmatpush1.msra.mxu0 %v128
    %244 = vmatprep.subr.mxu0 %v133
    %245 = vmatpush1.msra.mxu0 %v132
    %246 = vmatprep.subr.mxu0 %v137
    %247 = vmatpush1.msra.mxu0 %v136
    %248 = vmatprep.subr.mxu0 %v141
    %249 = vmatpush1.msra.mxu0 %v140
    %250 = vmatprep.subr.mxu0 %v145
    %251 = vmatpush1.msra.mxu0 %v144
    %252 = vmatprep.subr.mxu0 %v149
    %253 = vmatpush1.msra.mxu0 %v148
    %254 = vmatprep.subr.mxu0 %v153
    %255 = vmatpush1.msra.mxu0 %v152
    %256 = vmatprep.subr.mxu0 %v157
    %257 = vmatpush1.msra.mxu0 %v156
    %258 = vmatprep.subr.mxu0 %v161
    %259 = vmatpush1.msra.mxu0 %v160
    %260 = vmatprep.subr.mxu0 %v165
    %261 = vmatpush1.msra.mxu0 %v164
    %262 = vmatprep.subr.mxu0 %v169
    %263 = vmatpush1.msra.mxu0 %v168
    %264 = vmatprep.subr.mxu0 %v173
    %265 = vmatpush1.msra.mxu0 %v172
    %266 = vmatprep.subr.mxu0 %v177
    %267 = vmatpush1.msra.mxu0 %v176
    %268 = vmatprep.subr.mxu0 %v181
    %269 = vmatpush1.msra.mxu0 %v180
    %270 = vmatprep.subr.mxu0 %v185
    %271 = vmatpush1.msra.mxu0 %v184
    %272 = vmatprep.subr.mxu0 %v189
    %273 = vmatpush1.msra.mxu0 %v188
    %274 = vmatprep.subr.mxu0 %v193
    %275 = vmatpush1.msra.mxu0 %v192
    %276 = vmatprep.subr.mxu0 %v197
    %277 = vmatpush1.msra.mxu0 %v196
    %278 = vmatprep.subr.mxu0 %v201
    %279 = vmatpush1.msra.mxu0 %v200
    %280 = vmatprep.subr.mxu0 %v205
    %281 = vmatpush1.msra.mxu0 %v204
    %282 = vmatprep.subr.mxu0 0.0
    %283 = vmatpush1.msra.mxu0 0.0
    %284 = vmatprep.subr.mxu0 0.0
    %285 = vmatpush1.msra.mxu0 0.0
    %286 = vmatprep.subr.mxu0 0.0
    %287 = vmatpush1.msra.mxu0 0.0
    %288 = vmatprep.subr.mxu0 0.0
    %289 = vmatpush1.msra.mxu0 0.0
    %290 = vmatprep.subr.mxu0 0.0
    %291 = vmatpush1.msra.mxu0 0.0
    %292 = vmatprep.subr.mxu0 0.0
    %293 = vmatpush1.msra.mxu0 0.0
    %294 = vmatprep.subr.mxu0 0.0
    %295 = vmatpush1.msra.mxu0 0.0
    %296 = vmatprep.subr.mxu0 0.0
    %297 = vmatpush1.msra.mxu0 0.0
    %298 = vmatprep.mubr.f32.mxu0 %v232
    %299 = vmatmul.mubr.f32.gmra.mrb[0].mxu0 %v110
    %v300 = vpop.f32.mrb[0].mxu0
    %v301 = vadd.f32 %v213, %v300
    %v302 = vpop.f32.mrb[0].mxu0
    %v303 = vadd.f32 %v217, %v302
    %304 = vdwg.mxu0
    %305 = vmatprep.subr.mxu0 %v115
    %306 = vmatpush1.msra.mxu0 %v114
    %307 = vmatprep.subr.mxu0 %v119
    %308 = vmatpush1.msra.mxu0 %v118
    %309 = vmatprep.subr.mxu0 %v123
    %310 = vmatpush1.msra.mxu0 %v122
    %311 = vmatprep.subr.mxu0 %v127
    %312 = vmatpush1.msra.mxu0 %v126
    %313 = vmatprep.subr.mxu0 %v131
    %314 = vmatpush1.msra.mxu0 %v130
    %315 = vmatprep.subr.mxu0 %v135
    %316 = vmatpush1.msra.mxu0 %v134
    %317 = vmatprep.subr.mxu0 %v139
    %318 = vmatpush1.msra.mxu0 %v138
    %319 = vmatprep.subr.mxu0 %v143
    %320 = vmatpush1.msra.mxu0 %v142
    %321 = vmatprep.subr.mxu0 %v147
    %322 = vmatpush1.msra.mxu0 %v146
    %323 = vmatprep.subr.mxu0 %v151
    %324 = vmatpush1.msra.mxu0 %v150
    %325 = vmatprep.subr.mxu0 %v155
    %326 = vmatpush1.msra.mxu0 %v154
    %327 = vmatprep.subr.mxu0 %v159
    %328 = vmatpush1.msra.mxu0 %v158
    %329 = vmatprep.subr.mxu0 %v163
    %330 = vmatpush1.msra.mxu0 %v162
    %331 = vmatprep.subr.mxu0 %v167
    %332 = vmatpush1.msra.mxu0 %v166
    %333 = vmatprep.subr.mxu0 %v171
    %334 = vmatpush1.msra.mxu0 %v170
    %335 = vmatprep.subr.mxu0 %v175
    %336 = vmatpush1.msra.mxu0 %v174
    %337 = vmatprep.subr.mxu0 %v179
    %338 = vmatpush1.msra.mxu0 %v178
    %339 = vmatprep.subr.mxu0 %v183
    %340 = vmatpush1.msra.mxu0 %v182
    %341 = vmatprep.subr.mxu0 %v187
    %342 = vmatpush1.msra.mxu0 %v186
    %343 = vmatprep.subr.mxu0 %v191
    %344 = vmatpush1.msra.mxu0 %v190
    %345 = vmatprep.subr.mxu0 %v195
    %346 = vmatpush1.msra.mxu0 %v194
    %347 = vmatprep.subr.mxu0 %v199
    %348 = vmatpush1.msra.mxu0 %v198
    %349 = vmatprep.subr.mxu0 %v203
    %350 = vmatpush1.msra.mxu0 %v202
    %351 = vmatprep.subr.mxu0 %v207
    %352 = vmatpush1.msra.mxu0 %v206
    %353 = vmatprep.subr.mxu0 0.0
    %354 = vmatpush1.msra.mxu0 0.0
    %355 = vmatprep.subr.mxu0 0.0
    %356 = vmatpush1.msra.mxu0 0.0
    %357 = vmatprep.subr.mxu0 0.0
    %358 = vmatpush1.msra.mxu0 0.0
    %359 = vmatprep.subr.mxu0 0.0
    %360 = vmatpush1.msra.mxu0 0.0
    %361 = vmatprep.subr.mxu0 0.0
    %362 = vmatpush1.msra.mxu0 0.0
    %363 = vmatprep.subr.mxu0 0.0
    %364 = vmatpush1.msra.mxu0 0.0
    %365 = vmatprep.subr.mxu0 0.0
    %366 = vmatpush1.msra.mxu0 0.0
    %367 = vmatprep.subr.mxu0 0.0
    %368 = vmatpush1.msra.mxu0 0.0
    %369 = vmatprep.mubr.f32.mxu0 %v232
    %370 = vmatmul.mubr.f32.gmra.mrb[0].mxu0 %v110
    %v371 = vpop.f32.mrb[0].mxu0
    %v372 = vadd.f32 %v221, %v371
    %v373 = vpop.f32.mrb[0].mxu0
    %v374 = vadd.f32 %v225, %v373
    %375 = vdwg.mxu0
    %v376 = vmax.f32 %v301, 0.0
    %v377 = vmax.f32 %v303, 0.0
    %v378 = vmax.f32 %v372, 0.0
    %v379 = vmax.f32 %v374, 0.0
    %v380 = vld [vmem:[%s3] sm:$0xff]
    %v381 = vld [vmem:[%s3 + $0x8] sm:$0xff]
    %v382 = vld [vmem:[%s3 + $0x10] sm:$0xff]
    %v383 = vld [vmem:[%s3 + $0x18] sm:$0xff]
    %v384 = vld [vmem:[%s3 + $0x20] sm:$0xff]
    %v385 = vld [vmem:[%s3 + $0x28] sm:$0xff]
    %v386 = vld [vmem:[%s3 + $0x30] sm:$0xff]
    %v387 = vld [vmem:[%s3 + $0x38] sm:$0xff]
    %v388 = vld [vmem:[%s3 + $0x40] sm:$0xff]
    %v389 = vld [vmem:[%s3 + $0x48] sm:$0xff]
    %v390 = vld [vmem:[%s3 + $0x50] sm:$0xff]
    %v391 = vld [vmem:[%s3 + $0x58] sm:$0xff]
    %v392 = vld [vmem:[%s3 + $0x60] sm:$0xff]
    %v393 = vld [vmem:[%s3 + $0x68] sm:$0xff]
    %v394 = vld [vmem:[%s3 + $0x70] sm:$0xff]
    %v395 = vld [vmem:[%s3 + $0x78] sm:$0xff]
    %v396 = vld [vmem:[%s3 + $0x80] sm:$0xff]
    %v397 = vld [vmem:[%s3 + $0x88] sm:$0xff]
    %v398 = vld [vmem:[%s3 + $0x90] sm:$0xff]
    %v399 = vld [vmem:[%s3 + $0x98] sm:$0xff]
    %v400 = vld [vmem:[%s3 + $0xa0] sm:$0xff]
    %v401 = vld [vmem:[%s3 + $0xa8] sm:$0xff]
    %v402 = vld [vmem:[%s3 + $0xb0] sm:$0xff]
    %v403 = vld [vmem:[%s3 + $0xb8] sm:$0xff]
    %v404 = vld [vmem:[%s3 + $0xc0] sm:$0xff]
    %v405 = vld [vmem:[%s3 + $0xc8] sm:$0xff]
    %v406 = vld [vmem:[%s3 + $0xd0] sm:$0xff]
    %v407 = vld [vmem:[%s3 + $0xd8] sm:$0xff]
    %v408 = vld [vmem:[%s3 + $0xe0] sm:$0xff]
    %v409 = vld [vmem:[%s3 + $0xe8] sm:$0xff]
    %v410 = vld [vmem:[%s3 + $0xf0] sm:$0xff]
    %v411 = vld [vmem:[%s3 + $0xf8] sm:$0xff]
    %v412 = vld [vmem:[%s3 + $0x100] sm:$0xff]
    %v413 = vld [vmem:[%s3 + $0x108] sm:$0xff]
    %v414 = vld [vmem:[%s3 + $0x110] sm:$0xff]
    %v415 = vld [vmem:[%s3 + $0x118] sm:$0xff]
    %v416 = vld [vmem:[%s3 + $0x120] sm:$0xff]
    %v417 = vld [vmem:[%s3 + $0x128] sm:$0xff]
    %v418 = vld [vmem:[%s3 + $0x130] sm:$0xff]
    %v419 = vld [vmem:[%s3 + $0x138] sm:$0xff]
    %v420 = vld [vmem:[%s3 + $0x140] sm:$0xff]
    %v421 = vld [vmem:[%s3 + $0x148] sm:$0xff]
    %v422 = vld [vmem:[%s3 + $0x150] sm:$0xff]
    %v423 = vld [vmem:[%s3 + $0x158] sm:$0xff]
    %v424 = vld [vmem:[%s3 + $0x160] sm:$0xff]
    %v425 = vld [vmem:[%s3 + $0x168] sm:$0xff]
    %v426 = vld [vmem:[%s3 + $0x170] sm:$0xff]
    %v427 = vld [vmem:[%s3 + $0x178] sm:$0xff]
    %v428 = vld [vmem:[%s3 + $0x180] sm:$0xff]
    %v429 = vld [vmem:[%s3 + $0x188] sm:$0xff]
    %v430 = vld [vmem:[%s3 + $0x190] sm:$0xff]
    %v431 = vld [vmem:[%s3 + $0x198] sm:$0xff]
    %v432 = vld [vmem:[%s3 + $0x1a0] sm:$0xff]
    %v433 = vld [vmem:[%s3 + $0x1a8] sm:$0xff]
    %v434 = vld [vmem:[%s3 + $0x1b0] sm:$0xff]
    %v435 = vld [vmem:[%s3 + $0x1b8] sm:$0xff]
    %v436 = vld [vmem:[%s3 + $0x1c0] sm:$0xff]
    %v437 = vld [vmem:[%s3 + $0x1c8] sm:$0xff]
    %v438 = vld [vmem:[%s3 + $0x1d0] sm:$0xff]
    %v439 = vld [vmem:[%s3 + $0x1d8] sm:$0xff]
    %v440 = vld [vmem:[%s3 + $0x1e0] sm:$0xff]
    %v441 = vld [vmem:[%s3 + $0x1e8] sm:$0xff]
    %v442 = vld [vmem:[%s3 + $0x1f0] sm:$0xff]
    %v443 = vld [vmem:[%s3 + $0x1f8] sm:$0xff]
    %v444 = vld [vmem:[%s4] sm:$0x1]
    %v446 = vlaneseq
    %v447 = vshrl.u32 %v446, 7
    %v448 = vsub.s32 0, %v447
    %v449 = vrot.slane %v444, %v448
    %451 = vmatprep.subr.mxu0 0.0
    %452 = vmatpush1.msra.mxu0 %v380
    %453 = vmatprep.subr.mxu0 0.0
    %454 = vmatpush1.msra.mxu0 %v381
    %455 = vmatprep.subr.mxu0 0.0
    %456 = vmatpush1.msra.mxu0 %v382
    %457 = vmatprep.subr.mxu0 0.0
    %458 = vmatpush1.msra.mxu0 %v383
    %459 = vmatprep.subr.mxu0 0.0
    %460 = vmatpush1.msra.mxu0 %v384
    %461 = vmatprep.subr.mxu0 0.0
    %462 = vmatpush1.msra.mxu0 %v385
    %463 = vmatprep.subr.mxu0 0.0
    %464 = vmatpush1.msra.mxu0 %v386
    %465 = vmatprep.subr.mxu0 0.0
    %466 = vmatpush1.msra.mxu0 %v387
    %467 = vmatprep.subr.mxu0 0.0
    %468 = vmatpush1.msra.mxu0 %v388
    %469 = vmatprep.subr.mxu0 0.0
    %470 = vmatpush1.msra.mxu0 %v389
    %471 = vmatprep.subr.mxu0 0.0
    %472 = vmatpush1.msra.mxu0 %v390
    %473 = vmatprep.subr.mxu0 0.0
    %474 = vmatpush1.msra.mxu0 %v391
    %475 = vmatprep.subr.mxu0 0.0
    %476 = vmatpush1.msra.mxu0 %v392
    %477 = vmatprep.subr.mxu0 0.0
    %478 = vmatpush1.msra.mxu0 %v393
    %479 = vmatprep.subr.mxu0 0.0
    %480 = vmatpush1.msra.mxu0 %v394
    %481 = vmatprep.subr.mxu0 0.0
    %482 = vmatpush1.msra.mxu0 %v395
    %483 = vmatprep.subr.mxu0 0.0
    %484 = vmatpush1.msra.mxu0 %v396
    %485 = vmatprep.subr.mxu0 0.0
    %486 = vmatpush1.msra.mxu0 %v397
    %487 = vmatprep.subr.mxu0 0.0
    %488 = vmatpush1.msra.mxu0 %v398
    %489 = vmatprep.subr.mxu0 0.0
    %490 = vmatpush1.msra.mxu0 %v399
    %491 = vmatprep.subr.mxu0 0.0
    %492 = vmatpush1.msra.mxu0 %v400
    %493 = vmatprep.subr.mxu0 0.0
    %494 = vmatpush1.msra.mxu0 %v401
    %495 = vmatprep.subr.mxu0 0.0
    %496 = vmatpush1.msra.mxu0 %v402
    %497 = vmatprep.subr.mxu0 0.0
    %498 = vmatpush1.msra.mxu0 %v403
    %499 = vmatprep.subr.mxu0 0.0
    %500 = vmatpush1.msra.mxu0 %v404
    %501 = vmatprep.subr.mxu0 0.0
    %502 = vmatpush1.msra.mxu0 %v405
    %503 = vmatprep.subr.mxu0 0.0
    %504 = vmatpush1.msra.mxu0 %v406
    %505 = vmatprep.subr.mxu0 0.0
    %506 = vmatpush1.msra.mxu0 %v407
    %507 = vmatprep.subr.mxu0 0.0
    %508 = vmatpush1.msra.mxu0 %v408
    %509 = vmatprep.subr.mxu0 0.0
    %510 = vmatpush1.msra.mxu0 %v409
    %511 = vmatprep.subr.mxu0 0.0
    %512 = vmatpush1.msra.mxu0 %v410
    %513 = vmatprep.subr.mxu0 0.0
    %514 = vmatpush1.msra.mxu0 %v411
    %515 = vmatprep.mubr.f32.mxu0 %v377
    %516 = vmatmul.mubr.f32.gmra.mrb[0].mxu0 %v376
    %v517 = vpop.f32.mrb[0].mxu0
    %v518 = vadd.f32 %v449, %v517
    %v519 = vpop.f32.mrb[0].mxu0
    %520 = vdwg.mxu0
    %521 = vmatprep.subr.mxu0 0.0
    %522 = vmatpush1.msra.mxu0 %v412
    %523 = vmatprep.subr.mxu0 0.0
    %524 = vmatpush1.msra.mxu0 %v413
    %525 = vmatprep.subr.mxu0 0.0
    %526 = vmatpush1.msra.mxu0 %v414
    %527 = vmatprep.subr.mxu0 0.0
    %528 = vmatpush1.msra.mxu0 %v415
    %529 = vmatprep.subr.mxu0 0.0
    %530 = vmatpush1.msra.mxu0 %v416
    %531 = vmatprep.subr.mxu0 0.0
    %532 = vmatpush1.msra.mxu0 %v417
    %533 = vmatprep.subr.mxu0 0.0
    %534 = vmatpush1.msra.mxu0 %v418
    %535 = vmatprep.subr.mxu0 0.0
    %536 = vmatpush1.msra.mxu0 %v419
    %537 = vmatprep.subr.mxu0 0.0
    %538 = vmatpush1.msra.mxu0 %v420
    %539 = vmatprep.subr.mxu0 0.0
    %540 = vmatpush1.msra.mxu0 %v421
    %541 = vmatprep.subr.mxu0 0.0
    %542 = vmatpush1.msra.mxu0 %v422
    %543 = vmatprep.subr.mxu0 0.0
    %544 = vmatpush1.msra.mxu0 %v423
    %545 = vmatprep.subr.mxu0 0.0
    %546 = vmatpush1.msra.mxu0 %v424
    %547 = vmatprep.subr.mxu0 0.0
    %548 = vmatpush1.msra.mxu0 %v425
    %549 = vmatprep.subr.mxu0 0.0
    %550 = vmatpush1.msra.mxu0 %v426
    %551 = vmatprep.subr.mxu0 0.0
    %552 = vmatpush1.msra.mxu0 %v427
    %553 = vmatprep.subr.mxu0 0.0
    %554 = vmatpush1.msra.mxu0 %v428
    %555 = vmatprep.subr.mxu0 0.0
    %556 = vmatpush1.msra.mxu0 %v429
    %557 = vmatprep.subr.mxu0 0.0
    %558 = vmatpush1.msra.mxu0 %v430
    %559 = vmatprep.subr.mxu0 0.0
    %560 = vmatpush1.msra.mxu0 %v431
    %561 = vmatprep.subr.mxu0 0.0
    %562 = vmatpush1.msra.mxu0 %v432
    %563 = vmatprep.subr.mxu0 0.0
    %564 = vmatpush1.msra.mxu0 %v433
    %565 = vmatprep.subr.mxu0 0.0
    %566 = vmatpush1.msra.mxu0 %v434
    %567 = vmatprep.subr.mxu0 0.0
    %568 = vmatpush1.msra.mxu0 %v435
    %569 = vmatprep.subr.mxu0 0.0
    %570 = vmatpush1.msra.mxu0 %v436
    %571 = vmatprep.subr.mxu0 0.0
    %572 = vmatpush1.msra.mxu0 %v437
    %573 = vmatprep.subr.mxu0 0.0
    %574 = vmatpush1.msra.mxu0 %v438
    %575 = vmatprep.subr.mxu0 0.0
    %576 = vmatpush1.msra.mxu0 %v439
    %577 = vmatprep.subr.mxu0 0.0
    %578 = vmatpush1.msra.mxu0 %v440
    %579 = vmatprep.subr.mxu0 0.0
    %580 = vmatpush1.msra.mxu0 %v441
    %581 = vmatprep.subr.mxu0 0.0
    %582 = vmatpush1.msra.mxu0 %v442
    %583 = vmatprep.subr.mxu0 0.0
    %584 = vmatpush1.msra.mxu0 %v443
    %585 = vmatprep.mubr.f32.mxu0 %v379
    %586 = vmatmul.mubr.f32.gmra.mrb[0].mxu0 %v378
    %v587 = vpop.f32.mrb[0].mxu0
    %v588 = vadd.f32 %v518, %v587
    %v589 = vpop.f32.mrb[0].mxu0
    %590 = vdwg.mxu0
    %v591 = vmax.f32 %v588, 0.0
    %v592 = vld [vmem:[#allocation4] sm:$0xff]
    %v593 = vld [vmem:[#allocation4 + $0x8] sm:$0xff]
    %v594 = vld [vmem:[%s6] sm:$0x1]
    %v596 = vlaneseq
    %v597 = vshrl.u32 %v596, 7
    %v598 = vsub.s32 0, %v597
    %v599 = vrot.slane %v594, %v598
    %601 = vrot.lane.b32.xlu0 %v111, 64
    %v602 = vpop.permute.xlu0 %601
    %vm603 = vcmask 130048
    %v604 = vsel %vm603, %v602, 0
    %606 = vmatprep.subr.mxu0 0.0
    %607 = vmatpush1.msra.mxu0 %v592
    %608 = vmatprep.subr.mxu0 0.0
    %609 = vmatpush1.msra.mxu0 %v593
    %610 = vmatprep.subr.mxu0 0.0
    %611 = vmatpush1.msra.mxu0 0.0
    %612 = vmatprep.subr.mxu0 0.0
    %613 = vmatpush1.msra.mxu0 0.0
    %614 = vmatprep.subr.mxu0 0.0
    %615 = vmatpush1.msra.mxu0 0.0
    %616 = vmatprep.subr.mxu0 0.0
    %617 = vmatpush1.msra.mxu0 0.0
    %618 = vmatprep.subr.mxu0 0.0
    %619 = vmatpush1.msra.mxu0 0.0
    %620 = vmatprep.subr.mxu0 0.0
    %621 = vmatpush1.msra.mxu0 0.0
    %622 = vmatprep.subr.mxu0 0.0
    %623 = vmatpush1.msra.mxu0 0.0
    %624 = vmatprep.subr.mxu0 0.0
    %625 = vmatpush1.msra.mxu0 0.0
    %626 = vmatprep.subr.mxu0 0.0
    %627 = vmatpush1.msra.mxu0 0.0
    %628 = vmatprep.subr.mxu0 0.0
    %629 = vmatpush1.msra.mxu0 0.0
    %630 = vmatprep.subr.mxu0 0.0
    %631 = vmatpush1.msra.mxu0 0.0
    %632 = vmatprep.subr.mxu0 0.0
    %633 = vmatpush1.msra.mxu0 0.0
    %634 = vmatprep.subr.mxu0 0.0
    %635 = vmatpush1.msra.mxu0 0.0
    %636 = vmatprep.subr.mxu0 0.0
    %637 = vmatpush1.msra.mxu0 0.0
    %638 = vmatprep.subr.mxu0 0.0
    %639 = vmatpush1.msra.mxu0 0.0
    %640 = vmatprep.subr.mxu0 0.0
    %641 = vmatpush1.msra.mxu0 0.0
    %642 = vmatprep.subr.mxu0 0.0
    %643 = vmatpush1.msra.mxu0 0.0
    %644 = vmatprep.subr.mxu0 0.0
    %645 = vmatpush1.msra.mxu0 0.0
    %646 = vmatprep.subr.mxu0 0.0
    %647 = vmatpush1.msra.mxu0 0.0
    %648 = vmatprep.subr.mxu0 0.0
    %649 = vmatpush1.msra.mxu0 0.0
    %650 = vmatprep.subr.mxu0 0.0
    %651 = vmatpush1.msra.mxu0 0.0
    %652 = vmatprep.subr.mxu0 0.0
    %653 = vmatpush1.msra.mxu0 0.0
    %654 = vmatprep.subr.mxu0 0.0
    %655 = vmatpush1.msra.mxu0 0.0
    %656 = vmatprep.subr.mxu0 0.0
    %657 = vmatpush1.msra.mxu0 0.0
    %658 = vmatprep.subr.mxu0 0.0
    %659 = vmatpush1.msra.mxu0 0.0
    %660 = vmatprep.subr.mxu0 0.0
    %661 = vmatpush1.msra.mxu0 0.0
    %662 = vmatprep.subr.mxu0 0.0
    %663 = vmatpush1.msra.mxu0 0.0
    %664 = vmatprep.subr.mxu0 0.0
    %665 = vmatpush1.msra.mxu0 0.0
    %666 = vmatprep.subr.mxu0 0.0
    %667 = vmatpush1.msra.mxu0 0.0
    %668 = vmatprep.subr.mxu0 0.0
    %669 = vmatpush1.msra.mxu0 0.0
    %670 = vmatprep.mubr.f32.mxu0 0.0
    %671 = vmatmul.mubr.f32.gmra.mrb[0].mxu0 %v604
    %v672 = vpop.f32.mrb[0].mxu0
    %v673 = vadd.f32 %v599, %v672
    %v674 = vpop.f32.mrb[0].mxu0
    %675 = vdwg.mxu0
    %v676 = vmax.f32 %v673, 0.0
    %v677 = vld [vmem:[%s7] sm:$0xff]
    %v678 = vld [vmem:[%s7 + $0x8] sm:$0xff]
    %v679 = vld [vmem:[%s7 + $0x10] sm:$0xff]
    %v680 = vld [vmem:[%s7 + $0x18] sm:$0xff]
    %v681 = vld [vmem:[#allocation6] sm:$0x1]
    %v683 = vlaneseq
    %v684 = vshrl.u32 %v683, 7
    %v685 = vsub.s32 0, %v684
    %v686 = vrot.slane %v681, %v685
    %vm688 = vcmask 261120
    %v690 = vsel %vm688, %v676, 0
    %692 = vmatprep.subr.mxu0 0.0
    %693 = vmatpush1.msra.mxu0 %v677
    %694 = vmatprep.subr.mxu0 0.0
    %695 = vmatpush1.msra.mxu0 %v678
    %696 = vmatprep.subr.mxu0 0.0
    %697 = vmatpush1.msra.mxu0 %v679
    %698 = vmatprep.subr.mxu0 0.0
    %699 = vmatpush1.msra.mxu0 %v680
    %700 = vmatprep.subr.mxu0 0.0
    %701 = vmatpush1.msra.mxu0 0.0
    %702 = vmatprep.subr.mxu0 0.0
    %703 = vmatpush1.msra.mxu0 0.0
    %704 = vmatprep.subr.mxu0 0.0
    %705 = vmatpush1.msra.mxu0 0.0
    %706 = vmatprep.subr.mxu0 0.0
    %707 = vmatpush1.msra.mxu0 0.0
    %708 = vmatprep.subr.mxu0 0.0
    %709 = vmatpush1.msra.mxu0 0.0
    %710 = vmatprep.subr.mxu0 0.0
    %711 = vmatpush1.msra.mxu0 0.0
    %712 = vmatprep.subr.mxu0 0.0
    %713 = vmatpush1.msra.mxu0 0.0
    %714 = vmatprep.subr.mxu0 0.0
    %715 = vmatpush1.msra.mxu0 0.0
    %716 = vmatprep.subr.mxu0 0.0
    %717 = vmatpush1.msra.mxu0 0.0
    %718 = vmatprep.subr.mxu0 0.0
    %719 = vmatpush1.msra.mxu0 0.0
    %720 = vmatprep.subr.mxu0 0.0
    %721 = vmatpush1.msra.mxu0 0.0
    %722 = vmatprep.subr.mxu0 0.0
    %723 = vmatpush1.msra.mxu0 0.0
    %724 = vmatprep.subr.mxu0 0.0
    %725 = vmatpush1.msra.mxu0 0.0
    %726 = vmatprep.subr.mxu0 0.0
    %727 = vmatpush1.msra.mxu0 0.0
    %728 = vmatprep.subr.mxu0 0.0
    %729 = vmatpush1.msra.mxu0 0.0
    %730 = vmatprep.subr.mxu0 0.0
    %731 = vmatpush1.msra.mxu0 0.0
    %732 = vmatprep.subr.mxu0 0.0
    %733 = vmatpush1.msra.mxu0 0.0
    %734 = vmatprep.subr.mxu0 0.0
    %735 = vmatpush1.msra.mxu0 0.0
    %736 = vmatprep.subr.mxu0 0.0
    %737 = vmatpush1.msra.mxu0 0.0
    %738 = vmatprep.subr.mxu0 0.0
    %739 = vmatpush1.msra.mxu0 0.0
    %740 = vmatprep.subr.mxu0 0.0
    %741 = vmatpush1.msra.mxu0 0.0
    %742 = vmatprep.subr.mxu0 0.0
    %743 = vmatpush1.msra.mxu0 0.0
    %744 = vmatprep.subr.mxu0 0.0
    %745 = vmatpush1.msra.mxu0 0.0
    %746 = vmatprep.subr.mxu0 0.0
    %747 = vmatpush1.msra.mxu0 0.0
    %748 = vmatprep.subr.mxu0 0.0
    %749 = vmatpush1.msra.mxu0 0.0
    %750 = vmatprep.subr.mxu0 0.0
    %751 = vmatpush1.msra.mxu0 0.0
    %752 = vmatprep.subr.mxu0 0.0
    %753 = vmatpush1.msra.mxu0 0.0
    %754 = vmatprep.subr.mxu0 0.0
    %755 = vmatpush1.msra.mxu0 0.0
    %756 = vmatprep.mubr.f32.mxu0 0.0
    %757 = vmatmul.mubr.f32.gmra.mrb[0].mxu0 %v690
    %v758 = vpop.f32.mrb[0].mxu0
    %v759 = vadd.f32 %v686, %v758
    %v760 = vpop.f32.mrb[0].mxu0
    %761 = vdwg.mxu0
    %v762 = vmax.f32 %v759, 0.0
    %v763 = vld [vmem:[%s9] sm:$0xff]
    %v764 = vld [vmem:[%s9 + $0x8] sm:$0xff]
    %v765 = vld [vmem:[%s9 + $0x10] sm:$0xff]
    %v766 = vld [vmem:[%s9 + $0x18] sm:$0xff]
    %v767 = vld [vmem:[%s9 + $0x20] sm:$0xff]
    %v768 = vld [vmem:[%s9 + $0x28] sm:$0xff]
    %v769 = vld [vmem:[%s9 + $0x30] sm:$0xff]
    %v770 = vld [vmem:[%s9 + $0x38] sm:$0xff]
    %v771 = vld [vmem:[%s10] sm:$0xff]
    %v772 = vld [vmem:[%s10 + $0x8] sm:$0xff]
    %v773 = vld [vmem:[%s10 + $0x10] sm:$0xff]
    %v774 = vld [vmem:[%s10 + $0x18] sm:$0xff]
    %v776 = vsel %vm688, %v762, 0
    %778 = vmatprep.subr.mxu0 0.0
    %779 = vmatpush1.msra.mxu0 %v771
    %780 = vmatprep.subr.mxu0 0.0
    %781 = vmatpush1.msra.mxu0 %v772
    %782 = vmatprep.subr.mxu0 0.0
    %783 = vmatpush1.msra.mxu0 %v773
    %784 = vmatprep.subr.mxu0 0.0
    %785 = vmatpush1.msra.mxu0 %v774
    %786 = vmatprep.subr.mxu0 0.0
    %787 = vmatpush1.msra.mxu0 0.0
    %788 = vmatprep.subr.mxu0 0.0
    %789 = vmatpush1.msra.mxu0 0.0
    %790 = vmatprep.subr.mxu0 0.0
    %791 = vmatpush1.msra.mxu0 0.0
    %792 = vmatprep.subr.mxu0 0.0
    %793 = vmatpush1.msra.mxu0 0.0
    %794 = vmatprep.subr.mxu0 0.0
    %795 = vmatpush1.msra.mxu0 0.0
    %796 = vmatprep.subr.mxu0 0.0
    %797 = vmatpush1.msra.mxu0 0.0
    %798 = vmatprep.subr.mxu0 0.0
    %799 = vmatpush1.msra.mxu0 0.0
    %800 = vmatprep.subr.mxu0 0.0
    %801 = vmatpush1.msra.mxu0 0.0
    %802 = vmatprep.subr.mxu0 0.0
    %803 = vmatpush1.msra.mxu0 0.0
    %804 = vmatprep.subr.mxu0 0.0
    %805 = vmatpush1.msra.mxu0 0.0
    %806 = vmatprep.subr.mxu0 0.0
    %807 = vmatpush1.msra.mxu0 0.0
    %808 = vmatprep.subr.mxu0 0.0
    %809 = vmatpush1.msra.mxu0 0.0
    %810 = vmatprep.subr.mxu0 0.0
    %811 = vmatpush1.msra.mxu0 0.0
    %812 = vmatprep.subr.mxu0 0.0
    %813 = vmatpush1.msra.mxu0 0.0
    %814 = vmatprep.subr.mxu0 0.0
    %815 = vmatpush1.msra.mxu0 0.0
    %816 = vmatprep.subr.mxu0 0.0
    %817 = vmatpush1.msra.mxu0 0.0
    %818 = vmatprep.subr.mxu0 0.0
    %819 = vmatpush1.msra.mxu0 0.0
    %820 = vmatprep.subr.mxu0 0.0
    %821 = vmatpush1.msra.mxu0 0.0
    %822 = vmatprep.subr.mxu0 0.0
    %823 = vmatpush1.msra.mxu0 0.0
    %824 = vmatprep.subr.mxu0 0.0
    %825 = vmatpush1.msra.mxu0 0.0
    %826 = vmatprep.subr.mxu0 0.0
    %827 = vmatpush1.msra.mxu0 0.0
    %828 = vmatprep.subr.mxu0 0.0
    %829 = vmatpush1.msra.mxu0 0.0
    %830 = vmatprep.subr.mxu0 0.0
    %831 = vmatpush1.msra.mxu0 0.0
    %832 = vmatprep.subr.mxu0 0.0
    %833 = vmatpush1.msra.mxu0 0.0
    %834 = vmatprep.subr.mxu0 0.0
    %835 = vmatpush1.msra.mxu0 0.0
    %836 = vmatprep.subr.mxu0 0.0
    %837 = vmatpush1.msra.mxu0 0.0
    %838 = vmatprep.subr.mxu0 0.0
    %839 = vmatpush1.msra.mxu0 0.0
    %840 = vmatprep.subr.mxu0 0.0
    %841 = vmatpush1.msra.mxu0 0.0
    %842 = vmatprep.mubr.f32.mxu0 0.0
    %843 = vmatmul.mubr.f32.gmra.mrb[0].mxu0 %v776
    %v844 = vpop.f32.mrb[0].mxu0
    %v845 = vadd.f32 0.0, %v844
    %v846 = vpop.f32.mrb[0].mxu0
    %847 = vdwg.mxu0
    %v849 = vsel %vm230, %v591, 0
    %851 = vmatprep.subr.mxu0 0.0
    %852 = vmatpush1.msra.mxu0 %v763
    %853 = vmatprep.subr.mxu0 0.0
    %854 = vmatpush1.msra.mxu0 %v764
    %855 = vmatprep.subr.mxu0 0.0
    %856 = vmatpush1.msra.mxu0 %v765
    %857 = vmatprep.subr.mxu0 0.0
    %858 = vmatpush1.msra.mxu0 %v766
    %859 = vmatprep.subr.mxu0 0.0
    %860 = vmatpush1.msra.mxu0 %v767
    %861 = vmatprep.subr.mxu0 0.0
    %862 = vmatpush1.msra.mxu0 %v768
    %863 = vmatprep.subr.mxu0 0.0
    %864 = vmatpush1.msra.mxu0 %v769
    %865 = vmatprep.subr.mxu0 0.0
    %866 = vmatpush1.msra.mxu0 %v770
    %867 = vmatprep.subr.mxu0 0.0
    %868 = vmatpush1.msra.mxu0 0.0
    %869 = vmatprep.subr.mxu0 0.0
    %870 = vmatpush1.msra.mxu0 0.0
    %871 = vmatprep.subr.mxu0 0.0
    %872 = vmatpush1.msra.mxu0 0.0
    %873 = vmatprep.subr.mxu0 0.0
    %874 = vmatpush1.msra.mxu0 0.0
    %875 = vmatprep.subr.mxu0 0.0
    %876 = vmatpush1.msra.mxu0 0.0
    %877 = vmatprep.subr.mxu0 0.0
    %878 = vmatpush1.msra.mxu0 0.0
    %879 = vmatprep.subr.mxu0 0.0
    %880 = vmatpush1.msra.mxu0 0.0
    %881 = vmatprep.subr.mxu0 0.0
    %882 = vmatpush1.msra.mxu0 0.0
    %883 = vmatprep.subr.mxu0 0.0
    %884 = vmatpush1.msra.mxu0 0.0
    %885 = vmatprep.subr.mxu0 0.0
    %886 = vmatpush1.msra.mxu0 0.0
    %887 = vmatprep.subr.mxu0 0.0
    %888 = vmatpush1.msra.mxu0 0.0
    %889 = vmatprep.subr.mxu0 0.0
    %890 = vmatpush1.msra.mxu0 0.0
    %891 = vmatprep.subr.mxu0 0.0
    %892 = vmatpush1.msra.mxu0 0.0
    %893 = vmatprep.subr.mxu0 0.0
    %894 = vmatpush1.msra.mxu0 0.0
    %895 = vmatprep.subr.mxu0 0.0
    %896 = vmatpush1.msra.mxu0 0.0
    %897 = vmatprep.subr.mxu0 0.0
    %898 = vmatpush1.msra.mxu0 0.0
    %899 = vmatprep.subr.mxu0 0.0
    %900 = vmatpush1.msra.mxu0 0.0
    %901 = vmatprep.subr.mxu0 0.0
    %902 = vmatpush1.msra.mxu0 0.0
    %903 = vmatprep.subr.mxu0 0.0
    %904 = vmatpush1.msra.mxu0 0.0
    %905 = vmatprep.subr.mxu0 0.0
    %906 = vmatpush1.msra.mxu0 0.0
    %907 = vmatprep.subr.mxu0 0.0
    %908 = vmatpush1.msra.mxu0 0.0
    %909 = vmatprep.subr.mxu0 0.0
    %910 = vmatpush1.msra.mxu0 0.0
    %911 = vmatprep.subr.mxu0 0.0
    %912 = vmatpush1.msra.mxu0 0.0
    %913 = vmatprep.subr.mxu0 0.0
    %914 = vmatpush1.msra.mxu0 0.0
    %915 = vmatprep.mubr.f32.mxu0 0.0
    %916 = vmatmul.mubr.f32.gmra.mrb[0].mxu0 %v849
    %v917 = vpop.f32.mrb[0].mxu0
    %v918 = vadd.f32 %v845, %v917
    %v919 = vpop.f32.mrb[0].mxu0
    %920 = vdwg.mxu0
    %v921 = vld [vmem:[%s11] sm:$0xff]
    %922 = vrot.lane.b32.xlu0 %v111, 48
    %v923 = vpop.permute.xlu0 %922
    %vm924 = vcmask 64512
    %v925 = vsel %vm924, %v923, 0
    %927 = vmatprep.subr.mxu0 0.0
    %928 = vmatpush1.msra.mxu0 %v921
    %929 = vmatprep.subr.mxu0 0.0
    %930 = vmatpush1.msra.mxu0 0.0
    %931 = vmatprep.subr.mxu0 0.0
    %932 = vmatpush1.msra.mxu0 0.0
    %933 = vmatprep.subr.mxu0 0.0
    %934 = vmatpush1.msra.mxu0 0.0
    %935 = vmatprep.subr.mxu0 0.0
    %936 = vmatpush1.msra.mxu0 0.0
    %937 = vmatprep.subr.mxu0 0.0
    %938 = vmatpush1.msra.mxu0 0.0
    %939 = vmatprep.subr.mxu0 0.0
    %940 = vmatpush1.msra.mxu0 0.0
    %941 = vmatprep.subr.mxu0 0.0
    %942 = vmatpush1.msra.mxu0 0.0
    %943 = vmatprep.subr.mxu0 0.0
    %944 = vmatpush1.msra.mxu0 0.0
    %945 = vmatprep.subr.mxu0 0.0
    %946 = vmatpush1.msra.mxu0 0.0
    %947 = vmatprep.subr.mxu0 0.0
    %948 = vmatpush1.msra.mxu0 0.0
    %949 = vmatprep.subr.mxu0 0.0
    %950 = vmatpush1.msra.mxu0 0.0
    %951 = vmatprep.subr.mxu0 0.0
    %952 = vmatpush1.msra.mxu0 0.0
    %953 = vmatprep.subr.mxu0 0.0
    %954 = vmatpush1.msra.mxu0 0.0
    %955 = vmatprep.subr.mxu0 0.0
    %956 = vmatpush1.msra.mxu0 0.0
    %957 = vmatprep.subr.mxu0 0.0
    %958 = vmatpush1.msra.mxu0 0.0
    %959 = vmatprep.subr.mxu0 0.0
    %960 = vmatpush1.msra.mxu0 0.0
    %961 = vmatprep.subr.mxu0 0.0
    %962 = vmatpush1.msra.mxu0 0.0
    %963 = vmatprep.subr.mxu0 0.0
    %964 = vmatpush1.msra.mxu0 0.0
    %965 = vmatprep.subr.mxu0 0.0
    %966 = vmatpush1.msra.mxu0 0.0
    %967 = vmatprep.subr.mxu0 0.0
    %968 = vmatpush1.msra.mxu0 0.0
    %969 = vmatprep.subr.mxu0 0.0
    %970 = vmatpush1.msra.mxu0 0.0
    %971 = vmatprep.subr.mxu0 0.0
    %972 = vmatpush1.msra.mxu0 0.0
    %973 = vmatprep.subr.mxu0 0.0
    %974 = vmatpush1.msra.mxu0 0.0
    %975 = vmatprep.subr.mxu0 0.0
    %976 = vmatpush1.msra.mxu0 0.0
    %977 = vmatprep.subr.mxu0 0.0
    %978 = vmatpush1.msra.mxu0 0.0
    %979 = vmatprep.subr.mxu0 0.0
    %980 = vmatpush1.msra.mxu0 0.0
    %981 = vmatprep.subr.mxu0 0.0
    %982 = vmatpush1.msra.mxu0 0.0
    %983 = vmatprep.subr.mxu0 0.0
    %984 = vmatpush1.msra.mxu0 0.0
    %985 = vmatprep.subr.mxu0 0.0
    %986 = vmatpush1.msra.mxu0 0.0
    %987 = vmatprep.subr.mxu0 0.0
    %988 = vmatpush1.msra.mxu0 0.0
    %989 = vmatprep.subr.mxu0 0.0
    %990 = vmatpush1.msra.mxu0 0.0
    %991 = vmatprep.mubr.f32.mxu0 0.0
    %992 = vmatmul.mubr.f32.gmra.mrb[0].mxu0 %v925
    %v993 = vpop.f32.mrb[0].mxu0
    %v994 = vadd.f32 0.0, %v993
    %v995 = vpop.f32.mrb[0].mxu0
    %996 = vdwg.mxu0
    %v997 = vadd.f32 %v918, %v994
    %v998 = vld [vmem:[#allocation7] sm:$0x1]
    %v1000 = vlaneseq
    %v1001 = vshrl.u32 %v1000, 7
    %v1002 = vsub.s32 0, %v1001
    %v1003 = vrot.slane %v998, %v1002
    %v1005 = vadd.f32 %v997, %v1003
    %v1006 = vmax.f32 %v1005, 0.0
    %v1007 = vld [vmem:[%s13] sm:$0xff]
    %v1008 = vld [vmem:[%s13 + $0x8] sm:$0xff]
    %v1009 = vld [vmem:[%s13 + $0x10] sm:$0xff]
    %v1010 = vld [vmem:[%s13 + $0x18] sm:$0xff]
    %v1011 = vld [vmem:[%s13 + $0x20] sm:$0xff]
    %v1012 = vld [vmem:[%s13 + $0x28] sm:$0xff]
    %v1013 = vld [vmem:[%s13 + $0x30] sm:$0xff]
    %v1014 = vld [vmem:[%s13 + $0x38] sm:$0xff]
    %v1015 = vld [vmem:[#allocation9] sm:$0x1]
    %v1017 = vlaneseq
    %v1018 = vshrl.u32 %v1017, 7
    %v1019 = vsub.s32 0, %v1018
    %v1020 = vrot.slane %v1015, %v1019
    %v1023 = vsel %vm230, %v1006, 0
    %1025 = vmatprep.subr.mxu0 0.0
    %1026 = vmatpush1.msra.mxu0 %v1007
    %1027 = vmatprep.subr.mxu0 0.0
    %1028 = vmatpush1.msra.mxu0 %v1008
    %1029 = vmatprep.subr.mxu0 0.0
    %1030 = vmatpush1.msra.mxu0 %v1009
    %1031 = vmatprep.subr.mxu0 0.0
    %1032 = vmatpush1.msra.mxu0 %v1010
    %1033 = vmatprep.subr.mxu0 0.0
    %1034 = vmatpush1.msra.mxu0 %v1011
    %1035 = vmatprep.subr.mxu0 0.0
    %1036 = vmatpush1.msra.mxu0 %v1012
    %1037 = vmatprep.subr.mxu0 0.0
    %1038 = vmatpush1.msra.mxu0 %v1013
    %1039 = vmatprep.subr.mxu0 0.0
    %1040 = vmatpush1.msra.mxu0 %v1014
    %1041 = vmatprep.subr.mxu0 0.0
    %1042 = vmatpush1.msra.mxu0 0.0
    %1043 = vmatprep.subr.mxu0 0.0
    %1044 = vmatpush1.msra.mxu0 0.0
    %1045 = vmatprep.subr.mxu0 0.0
    %1046 = vmatpush1.msra.mxu0 0.0
    %1047 = vmatprep.subr.mxu0 0.0
    %1048 = vmatpush1.msra.mxu0 0.0
    %1049 = vmatprep.subr.mxu0 0.0
    %1050 = vmatpush1.msra.mxu0 0.0
    %1051 = vmatprep.subr.mxu0 0.0
    %1052 = vmatpush1.msra.mxu0 0.0
    %1053 = vmatprep.subr.mxu0 0.0
    %1054 = vmatpush1.msra.mxu0 0.0
    %1055 = vmatprep.subr.mxu0 0.0
    %1056 = vmatpush1.msra.mxu0 0.0
    %1057 = vmatprep.subr.mxu0 0.0
    %1058 = vmatpush1.msra.mxu0 0.0
    %1059 = vmatprep.subr.mxu0 0.0
    %1060 = vmatpush1.msra.mxu0 0.0
    %1061 = vmatprep.subr.mxu0 0.0
    %1062 = vmatpush1.msra.mxu0 0.0
    %1063 = vmatprep.subr.mxu0 0.0
    %1064 = vmatpush1.msra.mxu0 0.0
    %1065 = vmatprep.subr.mxu0 0.0
    %1066 = vmatpush1.msra.mxu0 0.0
    %1067 = vmatprep.subr.mxu0 0.0
    %1068 = vmatpush1.msra.mxu0 0.0
    %1069 = vmatprep.subr.mxu0 0.0
    %1070 = vmatpush1.msra.mxu0 0.0
    %1071 = vmatprep.subr.mxu0 0.0
    %1072 = vmatpush1.msra.mxu0 0.0
    %1073 = vmatprep.subr.mxu0 0.0
    %1074 = vmatpush1.msra.mxu0 0.0
    %1075 = vmatprep.subr.mxu0 0.0
    %1076 = vmatpush1.msra.mxu0 0.0
    %1077 = vmatprep.subr.mxu0 0.0
    %1078 = vmatpush1.msra.mxu0 0.0
    %1079 = vmatprep.subr.mxu0 0.0
    %1080 = vmatpush1.msra.mxu0 0.0
    %1081 = vmatprep.subr.mxu0 0.0
    %1082 = vmatpush1.msra.mxu0 0.0
    %1083 = vmatprep.subr.mxu0 0.0
    %1084 = vmatpush1.msra.mxu0 0.0
    %1085 = vmatprep.subr.mxu0 0.0
    %1086 = vmatpush1.msra.mxu0 0.0
    %1087 = vmatprep.subr.mxu0 0.0
    %1088 = vmatpush1.msra.mxu0 0.0
    %1089 = vmatprep.mubr.f32.mxu0 0.0
    %1090 = vmatmul.mubr.f32.gmra.mrb[0].mxu0 %v1023
    %v1091 = vpop.f32.mrb[0].mxu0
    %v1092 = vadd.f32 %v1020, %v1091
    %v1093 = vpop.f32.mrb[0].mxu0
    %1094 = vdwg.mxu0
    %vm1095 = vcmask 48128
    %v1096 = vsel %vm1095, %v1092, -inf
    %1097 = vmax.xlane.f32.xlu0 %v1096
    %v1098 = vpop.xlane.xlu0 %1097
    %v1099 = vsub.f32 %v1092, %v1098
    %v1100 = vmul.f32 %v1099, 1.442695
    %v1101 = vpow.pop %v1100
    %v1102 = vsel %vm1095, %v1101, 0.0
    %1103 = vadd.xlane.f32.xlu0 %v1102
    %v1104 = vpop.xlane.xlu0 %1103
    %v1105 = vrcp.pop %v1104
    %v1106 = vmul.f32 %v1101, %v1105
    %1107 = vst.msk [vmem:[%s15] sm:$0xff] %vm1095, %v1106
    // Predicated region
    $region82: #{forward.1} parent=1 // pred_check
      _
    $region83: #{forward.1} parent=1 // pred_check_branch
      %1109 = sbr.rel (0) target = $region85
    $region84: #{forward.1} parent=1 // pred_region
      _
    $region85: #{forward.1} parent=1 // pred_fallthru
      _
    // Predicated region
    $region86: #{forward.1} parent=1 // pred_check
      _
    $region87: #{forward.1} parent=1 // pred_check_branch
      %1111 = sbr.rel (0) target = $region89
    $region88: #{forward.1} parent=1 // pred_region
      _
    $region89: #{forward.1} parent=1 // pred_fallthru
      _
    %1112 = vsyncpa [#allocation3], 1
    %1113 = vsyncpa [#allocation5], 1
    %1114 = vsyncpa [#allocation8], 1

</llo_original>
